<compile_context>
chip_gen: v5e
topology: v5e:2x2
jax: 0.10.0
libtpu: 0.0.40
codegen_flags: <defaults>
</compile_context>

<pallas_src>
import functools

import jax
import jax.numpy as jnp
from jax import lax
from jax.experimental import pallas as pl
from jax.experimental.pallas import tpu as pltpu

LEAKY_SLOPE = 0.1   # darknet_conv uses nn.LeakyReLU(0.1)
BN_EPS = 1e-5


def _round_up(x, m):
    return ((x + m - 1) // m) * m


def _vmem_limit_bytes():
    """Generation-aware scoped-VMEM budget (~48 MiB on v7x, ~96 MiB on v5e/v6e)."""
    try:
        cap = int(pltpu.get_tpu_info().vmem_capacity_bytes)
    except Exception:
        cap = 64 * 1024 * 1024          # conservative (v7x) fallback
    return max(32 * 1024 * 1024, min((cap * 3) // 4, 96 * 1024 * 1024))


_VMEM_LIMIT = _vmem_limit_bytes()


# ---------------------------------------------------------------------------
# Pallas kernels: single-k-step matmul fused with BN bias, LeakyReLU
# (and optionally the residual add of a darknetblock unit).
# BN scale is pre-folded into the weight columns, so no scale operand.
# ---------------------------------------------------------------------------
def _kernel_plain(x_ref, w_ref, b_ref, o_ref):
    y = jnp.dot(x_ref[...], w_ref[...], preferred_element_type=jnp.float32)
    y = y + b_ref[...]
    o_ref[...] = jnp.where(y > 0, y, LEAKY_SLOPE * y).astype(o_ref.dtype)


def _kernel_residual(x_ref, w_ref, b_ref, r_ref, o_ref):
    y = jnp.dot(x_ref[...], w_ref[...], preferred_element_type=jnp.float32)
    y = y + b_ref[...]
    y = jnp.where(y > 0, y, LEAKY_SLOPE * y)
    # PyTorch semantics: x + leaky(bn(conv(h)))  -> add AFTER the activation.
    y = y + r_ref[...].astype(jnp.float32)
    o_ref[...] = y.astype(o_ref.dtype)


@functools.partial(jax.jit, static_argnames=("tm",))
def _fused_matmul(x, w, bias, residual, *, tm):
    """out = leaky(x @ w + bias) [+ residual]; bf16 in / bf16 out, f32 accum.

    Weight is VMEM-resident (full K x Np block, constant index, single
    buffer); patches / residual / output stream along the M grid axis.
    """
    Mp, K = x.shape
    _, Np = w.shape
    has_residual = residual is not None
    grid = (Mp // tm,)

    in_specs = [
        pl.BlockSpec((tm, K), lambda i: (i, 0)),                       # patches (bf16)
        pl.BlockSpec((K, Np), lambda i: (0, 0),
                     pipeline_mode=pl.Buffered(1)),                    # weights, resident
        pl.BlockSpec((1, Np), lambda i: (0, 0)),                       # bn bias (f32)
    ]
    args = [x, w, bias]
    if has_residual:
        in_specs.append(pl.BlockSpec((tm, Np), lambda i: (i, 0)))      # shortcut (bf16)
        args.append(residual)

    return pl.pallas_call(
        _kernel_residual if has_residual else _kernel_plain,
        out_shape=jax.ShapeDtypeStruct((Mp, Np), jnp.bfloat16),
        grid_spec=pltpu.PrefetchScalarGridSpec(
            num_scalar_prefetch=0,
            grid=grid,
            in_specs=in_specs,
            out_specs=pl.BlockSpec((tm, Np), lambda i: (i, 0)),
        ),
        compiler_params=pltpu.CompilerParams(
            dimension_semantics=("parallel",),
            vmem_limit_bytes=_VMEM_LIMIT,
        ),
    )(*args)


# ---------------------------------------------------------------------------
# Tiling policy: tn = full Np, tk = full K (weight resident); tm budgeted
# against the scoped VMEM limit and chosen to divide M on the big-M layers.
# ---------------------------------------------------------------------------
def _pick_tm(M, K, Np, has_residual):
    fixed = K * Np * 2 + 2 * Np * 4                              # resident W + bias bufs
    per_row = 2 * K * 2 + 2 * Np * 2 + (2 * Np * 2 if has_residual else 0)
    budget = max(_VMEM_LIMIT - fixed - (4 << 20), 1 << 20)       # Mosaic scratch headroom
    cap = max(16, (budget // per_row) // 16 * 16)
    if M < 256:
        return min(_round_up(M, 16), cap)
    for cand in (1024, 512, 256, 128):
        if cand <= cap and M % cand == 0:
            return cand
    return min(_round_up(M, 16), cap)


# ---------------------------------------------------------------------------
# Conv wrapper: im2col (glue, bf16) + Pallas fused matmul (hot path)
# ---------------------------------------------------------------------------
def darknet_conv_apply(x_nhwc, p, shortcut=None):
    """Conv2d(bias=False, pad=(k-1)//2) + BN(eval) + LeakyReLU(0.1) [+ shortcut]."""
    stride = p["stride"]
    ksize = p["ksize"]
    in_ch = p["in_ch"]
    out_ch = p["out_ch"]
    w2 = p["w2"]                                   # (K, Np) bf16, scale-folded
    bias = p["bias"]                               # (1, Np) f32
    Np = w2.shape[1]
    pad = (ksize - 1) // 2

    B, H, W, C = x_nhwc.shape
    assert C == in_ch
    Ho = (H + 2 * pad - ksize) // stride + 1
    Wo = (W + 2 * pad - ksize) // stride + 1

    if ksize == 1 and stride == 1:
        patches = x_nhwc
    else:
        # TODO(synk): replace with implicit GEMM (shifted-window DMA) to avoid
        #             materializing the ksize^2-wide patch matrix through HBM.
        xp = jnp.pad(x_nhwc, ((0, 0), (pad, pad), (pad, pad), (0, 0)))
        chunks = []
        for dy in range(ksize):
            for dx in range(ksize):
                chunks.append(xp[:, dy:dy + (Ho - 1) * stride + 1:stride,
                                  dx:dx + (Wo - 1) * stride + 1:stride, :])
        patches = jnp.concatenate(chunks, axis=-1)

    M = B * Ho * Wo
    K = ksize * ksize * in_ch
    x2 = patches.reshape(M, K)

    tm = _pick_tm(M, K, Np, shortcut is not None)
    Mp = _round_up(M, tm)
    if Mp > M:
        x2 = jnp.pad(x2, ((0, Mp - M), (0, 0)))

    res2 = None
    if shortcut is not None:
        res2 = shortcut.reshape(M, out_ch)
        if Np > out_ch:
            res2 = jnp.pad(res2, ((0, 0), (0, Np - out_ch)))
        if Mp > M:
            res2 = jnp.pad(res2, ((0, Mp - M), (0, 0)))

    out = _fused_matmul(x2, w2, bias, res2, tm=tm)
    if Mp > M or Np > out_ch:
        out = out[:M, :out_ch]
    return out.reshape(B, Ho, Wo, out_ch)


# ---------------------------------------------------------------------------
# Deterministic parameter construction mirroring DarkNet53.__init__
# ---------------------------------------------------------------------------
def _conv_params(key, in_ch, out_ch, ksize, stride):
    kw_, kb_ = jax.random.split(key)
    fan_in = in_ch * ksize * ksize
    w = jax.random.normal(kw_, (out_ch, in_ch, ksize, ksize), jnp.float32)
    w = w * jnp.sqrt(2.0 / fan_in)
    return {
        "w": w,                                   # OIHW, f32 (reference copy)
        "gamma": jnp.ones((out_ch,), jnp.float32),
        "beta": 0.01 * jax.random.normal(kb_, (out_ch,), jnp.float32),
        "mean": jnp.zeros((out_ch,), jnp.float32),
        "var": jnp.ones((out_ch,), jnp.float32),
        "stride": stride,
    }


def build_darknet53_params(key):
    it = iter(jax.random.split(key, 128))
    modules = []

    def conv(in_ch, out_ch, ksize, stride):
        modules.append(("conv", _conv_params(next(it), in_ch, out_ch, ksize, stride)))

    def block(ch, nblocks=1, shortcut=True):
        blocks = []
        for _ in range(nblocks):
            blocks.append((_conv_params(next(it), ch, ch // 2, 1, 1),
                           _conv_params(next(it), ch // 2, ch, 3, 1)))
        modules.append(("block", {"blocks": blocks, "shortcut": shortcut}))

    conv(3, 32, 3, 1)
    conv(32, 64, 3, 2)
    block(64)
    conv(64, 128, 3, 2)
    block(128, 2)
    conv(128, 256, 3, 2)
    block(256, 8)
    conv(256, 512, 3, 2)
    block(512, 8)
    conv(512, 1024, 3, 2)
    block(1024, 4)
    block(1024, 2, shortcut=False)
    conv(1024, 512, 1, 1)
    conv(512, 1024, 3, 1)
    return modules


# ---------------------------------------------------------------------------
# One-time kernel-ready parameter prep (hoisted off the forward path):
#   * eval-mode BN scale folded into the weight columns in f32,
#   * weights reshaped to (K, N), cast to bf16, N padded to a multiple of 128
#     (lane-dense output stores), BN bias padded with zeros.
# ---------------------------------------------------------------------------
def _prepare_conv(p):
    w = p["w"]                                    # (out_ch, in_ch, kh, kw)
    out_ch, in_ch, kh, kw = w.shape
    K = kh * kw * in_ch
    N = out_ch
    Np = _round_up(max(N, 128), 128)

    scale = p["gamma"] / jnp.sqrt(p["var"] + BN_EPS)
    bias = p["beta"] - p["mean"] * scale
    w_folded = w * scale[:, None, None, None]     # fold BN scale (f32) into weights
    # K ordered (dy, dx, cin) to match the im2col chunk order.
    w2 = jnp.transpose(w_folded, (2, 3, 1, 0)).reshape(K, N).astype(jnp.bfloat16)
    if Np > N:
        w2 = jnp.pad(w2, ((0, 0), (0, Np - N)))
        bias = jnp.pad(bias, (0, Np - N))
    return {
        "w2": w2,
        "bias": bias.reshape(1, Np).astype(jnp.float32),
        "stride": p["stride"],
        "ksize": kh,
        "in_ch": in_ch,
        "out_ch": out_ch,
    }


def prepare_darknet53(modules):
    prepared = []
    for kind, payload in modules:
        if kind == "conv":
            prepared.append((kind, _prepare_conv(payload)))
        else:
            blocks = [(_prepare_conv(p1), _prepare_conv(p3))
                      for p1, p3 in payload["blocks"]]
            prepared.append((kind, {"blocks": blocks,
                                    "shortcut": payload["shortcut"]}))
    return prepared


# ---------------------------------------------------------------------------
# Forward pass (mirrors DarkNet53.forward)
# ---------------------------------------------------------------------------
def darknet53_forward(x_nchw, prepared_modules, multi_scale_outputs=False):
    x = jnp.transpose(x_nchw, (0, 2, 3, 1)).astype(jnp.bfloat16)   # NCHW -> NHWC
    outputs = []
    for i, (kind, payload) in enumerate(prepared_modules):
        if kind == "conv":
            x = darknet_conv_apply(x, payload)
        else:
            for p1, p3 in payload["blocks"]:
                h = darknet_conv_apply(x, p1)
                # residual add fused into the second conv's epilogue
                x = darknet_conv_apply(
                    h, p3, shortcut=x if payload["shortcut"] else None)
        if i in (6, 8):
            outputs.append(jnp.transpose(x, (0, 3, 1, 2)).astype(jnp.float32))
    out = jnp.transpose(x, (0, 3, 1, 2)).astype(jnp.float32)        # back to NCHW
    outputs.append(out)
    return outputs if multi_scale_outputs else out


# ---------------------------------------------------------------------------
# Pure-JAX reference with matching bf16-operand / f32-accumulation rounding
# (for numerical validation of the Pallas path)
# ---------------------------------------------------------------------------
def _ref_conv(x_nchw, p, shortcut=None):
    w = p["w"].astype(jnp.bfloat16)
    stride = p["stride"]
    pad = (w.shape[2] - 1) // 2
    y = lax.conv_general_dilated(
        x_nchw.astype(jnp.bfloat16), w, window_strides=(stride, stride),
        padding=[(pad, pad), (pad, pad)],
        dimension_numbers=("NCHW", "OIHW", "NCHW"),
        preferred_element_type=jnp.float32)
    scale_vec = p["gamma"] / jnp.sqrt(p["var"] + BN_EPS)
    bias_vec = p["beta"] - p["mean"] * scale_vec
    y = y * scale_vec.reshape(1, -1, 1, 1) + bias_vec.reshape(1, -1, 1, 1)
    y = jnp.where(y > 0, y, LEAKY_SLOPE * y)
    if shortcut is not None:
        y = y + shortcut.astype(jnp.float32)
    return y.astype(jnp.bfloat16)


def darknet53_reference(x_nchw, modules):
    x = x_nchw.astype(jnp.bfloat16)
    for kind, payload in modules:
        if kind == "conv":
            x = _ref_conv(x, payload)
        else:
            for p1, p3 in payload["blocks"]:
                h = _ref_conv(x, p1)
                x = _ref_conv(h, p3, shortcut=x if payload["shortcut"] else None)
    return x.astype(jnp.float32)


if __name__ == "__main__":
    key = jax.random.PRNGKey(0)
    kp, kx = jax.random.split(key)
    modules = build_darknet53_params(kp)
    prepared = prepare_darknet53(modules)

    # Input must be 3-channel; spatial divisible by 32 (5 stride-2 convs).
    x = jax.random.normal(kx, (2, 3, 64, 64), jnp.float32)

    fwd = jax.jit(lambda inp: darknet53_forward(inp, prepared,
                                                multi_scale_outputs=False))
    out = jax.block_until_ready(fwd(x))
    assert out.shape == (2, 1024, 2, 2), out.shape
    assert bool(jnp.all(jnp.isfinite(out)))

    ref_fn = jax.jit(lambda inp: darknet53_reference(inp, modules))
    ref = jax.block_until_ready(ref_fn(x))
    rel_err = float(jnp.max(jnp.abs(out - ref)) / (jnp.max(jnp.abs(ref)) + 1e-6))
    assert rel_err < 5e-2, f"mismatch vs reference: rel err {rel_err}"

    print("KERNEL_OK")
</pallas_src>

<mosaic_0001>
module attributes {stable_mosaic.version = 11 : i64} {
  func.func @_kernel_plain(%arg0: i32, %arg1: memref<1024x27xbf16, #tpu.memory_space<vmem>>, %arg2: memref<27x128xbf16, #tpu.memory_space<vmem>>, %arg3: memref<1x128xf32, #tpu.memory_space<vmem>>, %arg4: memref<1024x128xbf16, #tpu.memory_space<vmem>>) attributes {dimension_semantics = [#tpu.dimension_semantics<parallel>], iteration_bounds = array<i64: 8>, scalar_prefetch = 0 : i64, scratch_operands = 0 : i64, tpu.core_type = #tpu.core_type<tc>, window_params = [{transform_indices = @transform_0, window_bounds = array<i64: 1024, 27>}, {pipeline_mode = #tpu.pipeline_mode<synchronous>, transform_indices = @transform_1, window_bounds = array<i64: 27, 128>}, {pipeline_mode = #tpu.pipeline_mode<synchronous>, transform_indices = @transform_2, window_bounds = array<i64: 1, 128>}, {transform_indices = @transform_3, window_bounds = array<i64: 1024, 128>}]} {
    %c0 = arith.constant 0 : index
    %c0_0 = arith.constant 0 : index
    %0 = vector.load %arg1[%c0, %c0_0] : memref<1024x27xbf16, #tpu.memory_space<vmem>>, vector<1024x27xbf16>
    %c0_1 = arith.constant 0 : index
    %c0_2 = arith.constant 0 : index
    %1 = vector.load %arg2[%c0_1, %c0_2] : memref<27x128xbf16, #tpu.memory_space<vmem>>, vector<27x128xbf16>
    %cst = arith.constant dense<0.000000e+00> : vector<1024x128xf32>
    %2 = tpu.matmul %0, %1, %cst {dimension_numbers = #tpu.dot_dimension_numbers<[1], [0], [0], [1], [0, 0, 1, 1], [], []>} : vector<1024x27xbf16>, vector<27x128xbf16>, vector<1024x128xf32> -> vector<1024x128xf32>
    %c0_3 = arith.constant 0 : index
    %c0_4 = arith.constant 0 : index
    %3 = vector.load %arg3[%c0_3, %c0_4] : memref<1x128xf32, #tpu.memory_space<vmem>>, vector<1x128xf32>
    %4 = vector.broadcast %3 : vector<1x128xf32> to vector<1024x128xf32>
    %5 = arith.addf %2, %4 : vector<1024x128xf32>
    %cst_5 = arith.constant 0.000000e+00 : f32
    %6 = vector.broadcast %cst_5 : f32 to vector<1024x128xf32>
    %7 = arith.cmpf ogt, %5, %6 : vector<1024x128xf32>
    %cst_6 = arith.constant 1.000000e-01 : f32
    %8 = vector.broadcast %cst_6 : f32 to vector<1024x128xf32>
    %9 = arith.mulf %8, %5 : vector<1024x128xf32>
    %10 = arith.select %7, %5, %9 : vector<1024x128xi1>, vector<1024x128xf32>
    %11 = arith.truncf %10 : vector<1024x128xf32> to vector<1024x128xbf16>
    %c0_7 = arith.constant 0 : index
    %c0_8 = arith.constant 0 : index
    %12 = vector.load %arg4[%c0_7, %c0_8] : memref<1024x128xbf16, #tpu.memory_space<vmem>>, vector<1024x128xbf16>
    tpu.vector_store %arg4[%c0_7, %c0_8], %11 {strides = array<i32>} : memref<1024x128xbf16, #tpu.memory_space<vmem>>, vector<1024x128xbf16>,
    return
  }
  func.func @transform_0(%arg0: i32) -> (i32, i32) {
    %c0_i32 = arith.constant 0 : i32
    %c0_i32_0 = arith.constant 0 : i32
    return %arg0, %c0_i32 : i32, i32
  }
  func.func @transform_1(%arg0: i32) -> (i32, i32) {
    %c0_i32 = arith.constant 0 : i32
    %c0_i32_0 = arith.constant 0 : i32
    %c0_i32_1 = arith.constant 0 : i32
    return %c0_i32, %c0_i32_0 : i32, i32
  }
  func.func @transform_2(%arg0: i32) -> (i32, i32) {
    %c0_i32 = arith.constant 0 : i32
    %c0_i32_0 = arith.constant 0 : i32
    %c0_i32_1 = arith.constant 0 : i32
    return %c0_i32, %c0_i32_0 : i32, i32
  }
  func.func @transform_3(%arg0: i32) -> (i32, i32) {
    %c0_i32 = arith.constant 0 : i32
    %c0_i32_0 = arith.constant 0 : i32
    return %arg0, %c0_i32 : i32, i32
  }
}

</mosaic_0001>

<llo_original>
// kernel: _fused_matmul.1
$region0: #{_fused_matmul.1}
  #allocation0 [shape = 'u32[]', space=smem, size = 0x4, offset = 0x4, fixed_abs, tag = 'smem constant byte address 0x4 - core index']
  #allocation1 [shape = 'u32[72,128]{1,0:T(1,128)}', space=vmem, size = 0x9000, scoped, tag = 'internal scratch']
  %s0 = inlined_call_operand.vmem [shape: bf16[8192,27], index: 0, kind: input, shape index: {}]
  %s1 = inlined_call_operand.vmem [shape: bf16[27,128], index: 1, kind: input, shape index: {}]
  %s2 = inlined_call_operand.vmem [shape: f32[1,128], index: 2, kind: input, shape index: {}]
  %s3 = inlined_call_operand.hbm [shape: bf16[8192,128], index: 3, kind: output, shape index: {}]
  %s4 = sld [smem:[#allocation0]]
  $region45: #{_fused_matmul.1} parent=0
    _
  %s6 = ssub.s32 1, %s4
  %s7 = scalar_select 0, %s6, %s4
  $region1: #{_fused_matmul.1} parent=0
    #allocation2 [shape = 'u8[524288]{0}', space=vmem, size = 0x80000, scoped, tag = 'output window, operand 0']
    #allocation3 [shape = 's32[2]{0}', space=sflag, size = 0x8, scoped, tag = 'scoped memory for _fused_matmul.1']
    %8 = vsyncpa [#allocation3], 0
    %s9 = scalar_lea.sflag [#allocation3], 1
    %10 = vsyncpa %s9, 0
    loop: start=0, step=1, limit=10
    $region2: #{_fused_matmul.1} parent=1 // loop_pre_header
      _
    $region3: #{_fused_matmul.1} parent=1 // loop_header
      %s12 = sphi 0, %s16
      %p13 = scmp.ge.s32.totalorder %s12, 10
      %s22 = sphi 0, %s24
      %s25 = sphi 0, %s22
      %s26 = sphi 0, %s25
      %s42 = sphi 0, %s26
      %s46 = sphi 0, %s46
      %s48 = sphi 0, %s46
      %s49 = sphi 0, %s48
      %s63 = sphi 0, %s49
      %s67 = sphi 0, %s67
      %s69 = sphi 0, %s67
      %s70 = sphi 0, %s69
      %s84 = sphi 0, %s70
      %s90 = sphi 0, %s92
      %s93 = sphi 0, %s90
      %s94 = sphi 0, %s93
      %s110 = sphi 0, %s94
    $region4: #{_fused_matmul.1} parent=1 // loop_header_branch
      %15 = sbr.rel (%p13) target = $region8
    $region5: #{_fused_matmul.1} parent=1 // loop_body
      %s17 = ssub.s32 %s12, 1
      %s18 = ssub.s32 %s12, 2
      %s19 = sadd.s32 %s12, 1
      %s20 = ssub.s32 %s12, %s19
      %p21 = scmp.eq.s32.totalorder %s20, 0
      %s23 = sadd.s32 %s22, 1
      %s24 = scalar_select %p21, %s22, %s23
      %p27 = pneg %p21
      %p28 = scmp.eq.s32.totalorder %s12, 7
      %p29 = por %p27, %p28
      %p30 = scmp.ne.s32.totalorder %s22, %s25
      %p31 = scmp.eq.s32.totalorder %s12, 0
      %p32 = por %p30, %p31
      %p33 = scmp.ne.s32.totalorder %s22, %s25
      %p34 = scmp.eq.s32.totalorder %s17, 7
      %p35 = por %p33, %p34
      %p36 = scmp.ne.s32.totalorder %s25, %s26
      %p37 = scmp.eq.s32.totalorder %s17, 0
      %p38 = por %p36, %p37
      %p39 = scmp.ne.s32.totalorder %s25, %s26
      %p40 = scmp.eq.s32.totalorder %s18, 7
      %p41 = por %p39, %p40
      %p43 = scmp.ne.s32.totalorder %s26, %s42
      %p44 = scmp.eq.s32.totalorder %s18, 0
      %p45 = por %p43, %p44
      %s47 = sadd.s32 %s46, 1
      %p50 = scmp.eq.s32.totalorder %s12, 7
      %p51 = scmp.ne.s32.totalorder %s46, %s48
      %p52 = scmp.eq.s32.totalorder %s12, 0
      %p53 = por %p51, %p52
      %p54 = scmp.ne.s32.totalorder %s46, %s48
      %p55 = scmp.eq.s32.totalorder %s17, 7
      %p56 = por %p54, %p55
      %p57 = scmp.ne.s32.totalorder %s48, %s49
      %p58 = scmp.eq.s32.totalorder %s17, 0
      %p59 = por %p57, %p58
      %p60 = scmp.ne.s32.totalorder %s48, %s49
      %p61 = scmp.eq.s32.totalorder %s18, 7
      %p62 = por %p60, %p61
      %p64 = scmp.ne.s32.totalorder %s49, %s63
      %p65 = scmp.eq.s32.totalorder %s18, 0
      %p66 = por %p64, %p65
      %s68 = sadd.s32 %s67, 1
      %p71 = scmp.eq.s32.totalorder %s12, 7
      %p72 = scmp.ne.s32.totalorder %s67, %s69
      %p73 = scmp.eq.s32.totalorder %s12, 0
      %p74 = por %p72, %p73
      %p75 = scmp.ne.s32.totalorder %s67, %s69
      %p76 = scmp.eq.s32.totalorder %s17, 7
      %p77 = por %p75, %p76
      %p78 = scmp.ne.s32.totalorder %s69, %s70
      %p79 = scmp.eq.s32.totalorder %s17, 0
      %p80 = por %p78, %p79
      %p81 = scmp.ne.s32.totalorder %s69, %s70
      %p82 = scmp.eq.s32.totalorder %s18, 7
      %p83 = por %p81, %p82
      %p85 = scmp.ne.s32.totalorder %s70, %s84
      %p86 = scmp.eq.s32.totalorder %s18, 0
      %p87 = por %p85, %p86
      %s88 = ssub.s32 %s12, %s19
      %p89 = scmp.eq.s32.totalorder %s88, 0
      %s91 = sadd.s32 %s90, 1
      %s92 = scalar_select %p89, %s90, %s91
      %p95 = pneg %p89
      %p96 = scmp.eq.s32.totalorder %s12, 7
      %p97 = por %p95, %p96
      %p98 = scmp.ne.s32.totalorder %s90, %s93
      %p99 = scmp.eq.s32.totalorder %s12, 0
      %p100 = por %p98, %p99
      %p101 = scmp.ne.s32.totalorder %s90, %s93
      %p102 = scmp.eq.s32.totalorder %s17, 7
      %p103 = por %p101, %p102
      %p104 = scmp.ne.s32.totalorder %s93, %s94
      %p105 = scmp.eq.s32.totalorder %s17, 0
      %p106 = por %p104, %p105
      %p107 = scmp.ne.s32.totalorder %s93, %s94
      %p108 = scmp.eq.s32.totalorder %s18, 7
      %p109 = por %p107, %p108
      %p111 = scmp.ne.s32.totalorder %s94, %s110
      %p112 = scmp.eq.s32.totalorder %s18, 0
      %p113 = por %p111, %p112
      %p114 = scmp.le.s32.totalorder 1, %s12
      %p115 = scmp.lt.s32.totalorder %s12, 9
      %p116 = pnand %p114, %p115
      %p117 = pneg %p116
      // Predicated region
      $region9: #{_fused_matmul.1} parent=5 // pred_check
        _
      $region10: #{_fused_matmul.1} parent=5 // pred_check_branch
        %119 = sbr.rel (%p116) target = $region12
      $region11: #{_fused_matmul.1} parent=5 // pred_region
        %s120 = ssub.s32 %s12, 1
        // Predicated region
        $region13: #{_fused_matmul.1} parent=11 // pred_check
          %p121 = pneg %p59
        $region14: #{_fused_matmul.1} parent=11 // pred_check_branch
          %123 = sbr.rel (%p121) target = $region16
        $region15: #{_fused_matmul.1} parent=11 // pred_region
          _
        $region16: #{_fused_matmul.1} parent=11 // pred_fallthru
          _
        // Predicated region
        $region17: #{_fused_matmul.1} parent=11 // pred_check
          %p124 = pneg %p80
        $region18: #{_fused_matmul.1} parent=11 // pred_check_branch
          %126 = sbr.rel (%p124) target = $region20
        $region19: #{_fused_matmul.1} parent=11 // pred_region
          _
        $region20: #{_fused_matmul.1} parent=11 // pred_fallthru
          _
      $region12: #{_fused_matmul.1} parent=5 // pred_fallthru
        _
      %p127 = scmp.lt.s32.totalorder %s12, 8
      // Predicated region
      $region21: #{_fused_matmul.1} parent=5 // pred_check
        %p128 = pneg %p127
      $region22: #{_fused_matmul.1} parent=5 // pred_check_branch
        %130 = sbr.rel (%p128) target = $region24
      $region23: #{_fused_matmul.1} parent=5 // pred_region
        // Predicated region
        $region25: #{_fused_matmul.1} parent=23 // pred_check
          %p131 = pneg %p32
        $region26: #{_fused_matmul.1} parent=23 // pred_check_branch
          %133 = sbr.rel (%p131) target = $region28
        $region27: #{_fused_matmul.1} parent=23 // pred_region
          %s134 = smul.u32 128, %s12
          %p135 = scmp.lt.s32.totalorder %s134, 1023
          %s136 = scalar_select %p135, %s134, 1023
          %s137 = smul.addr %s136, 4
          %s138 = scalar_lea.vmem %s0, %s137
          %s139 = smul.u32 128, %s12
        $region28: #{_fused_matmul.1} parent=23 // pred_fallthru
          _
      $region24: #{_fused_matmul.1} parent=5 // pred_fallthru
        _
      %p140 = scmp.le.s32.totalorder 1, %s12
      %p141 = scmp.lt.s32.totalorder %s12, 9
      %p142 = pnand %p140, %p141
      %p143 = pneg %p142
      // Predicated region
      $region29: #{_fused_matmul.1} parent=5 // pred_check
        _
      $region30: #{_fused_matmul.1} parent=5 // pred_check_branch
        %145 = sbr.rel (%p142) target = $region32
      $region31: #{_fused_matmul.1} parent=5 // pred_region
        %s146 = ssub.s32 %s12, 1
        %s147 = smul.u32 128, %s17
        %p148 = scmp.lt.s32.totalorder %s147, 1023
        %s149 = scalar_select %p148, %s147, 1023
        %s150 = smul.addr %s149, 4
        %s151 = scalar_lea.vmem %s0, %s150
        %p152 = pneg %p38
        %p153 = pneg %p35
        %p154 = pneg %p59
        %p155 = pneg %p56
        %p156 = pneg %p80
        %p157 = pneg %p77
        %p158 = pneg %p106
        %p159 = pneg %p103
        %s160 = sand.u32 %s93, 1
        %s161 = scalar_lea.sflag [#allocation3], %s160
        %s162 = sand.u32 %s93, 1
        %s163 = smul.addr %s162, 512
        %s164 = scalar_lea.vmem [#allocation2], %s163
        %s165 = smul.u32 128, %s17
        %p166 = scmp.lt.s32.totalorder %s165, 1023
        %s167 = scalar_select %p166, %s165, 1023
        %s168 = smul.addr %s167, 4
        %s169 = scalar_lea.vmem %s0, %s168
        %s170 = smul.u32 128, %s17
        %s171 = smul.u32 128, %s17
        %v173 = vld [vmem:[%s169] sm:$0xf]
        %v174 = vld [vmem:[%s169 + $0x4] sm:$0xf]
        %v175 = vld [vmem:[%s169 + $0x8] sm:$0xf]
        %v176 = vld [vmem:[%s169 + $0xc] sm:$0xf]
        %v177 = vld [vmem:[%s169 + $0x10] sm:$0xf]
        %v178 = vld [vmem:[%s169 + $0x14] sm:$0xf]
        %v179 = vld [vmem:[%s169 + $0x18] sm:$0xf]
        %v180 = vld [vmem:[%s169 + $0x1c] sm:$0xf]
        %v181 = vld [vmem:[%s169 + $0x20] sm:$0xf]
        %v182 = vld [vmem:[%s169 + $0x24] sm:$0xf]
        %v183 = vld [vmem:[%s169 + $0x28] sm:$0xf]
        %v184 = vld [vmem:[%s169 + $0x2c] sm:$0xf]
        %v185 = vld [vmem:[%s169 + $0x30] sm:$0xf]
        %v186 = vld [vmem:[%s169 + $0x34] sm:$0xf]
        %v187 = vld [vmem:[%s169 + $0x38] sm:$0xf]
        %v188 = vld [vmem:[%s169 + $0x3c] sm:$0xf]
        %v189 = vld [vmem:[%s169 + $0x40] sm:$0xf]
        %v190 = vld [vmem:[%s169 + $0x44] sm:$0xf]
        %v191 = vld [vmem:[%s169 + $0x48] sm:$0xf]
        %v192 = vld [vmem:[%s169 + $0x4c] sm:$0xf]
        %v193 = vld [vmem:[%s169 + $0x50] sm:$0xf]
        %v194 = vld [vmem:[%s169 + $0x54] sm:$0xf]
        %v195 = vld [vmem:[%s169 + $0x58] sm:$0xf]
        %v196 = vld [vmem:[%s169 + $0x5c] sm:$0xf]
        %v197 = vld [vmem:[%s169 + $0x60] sm:$0xf]
        %v198 = vld [vmem:[%s169 + $0x64] sm:$0xf]
        %v199 = vld [vmem:[%s169 + $0x68] sm:$0xf]
        %v200 = vld [vmem:[%s169 + $0x6c] sm:$0xf]
        %v201 = vld [vmem:[%s169 + $0x70] sm:$0xf]
        %v202 = vld [vmem:[%s169 + $0x74] sm:$0xf]
        %v203 = vld [vmem:[%s169 + $0x78] sm:$0xf]
        %v204 = vld [vmem:[%s169 + $0x7c] sm:$0xf]
        %v205 = vld [vmem:[%s169 + $0x80] sm:$0xf]
        %v206 = vld [vmem:[%s169 + $0x84] sm:$0xf]
        %v207 = vld [vmem:[%s169 + $0x88] sm:$0xf]
        %v208 = vld [vmem:[%s169 + $0x8c] sm:$0xf]
        %v209 = vld [vmem:[%s169 + $0x90] sm:$0xf]
        %v210 = vld [vmem:[%s169 + $0x94] sm:$0xf]
        %v211 = vld [vmem:[%s169 + $0x98] sm:$0xf]
        %v212 = vld [vmem:[%s169 + $0x9c] sm:$0xf]
        %v213 = vld [vmem:[%s169 + $0xa0] sm:$0xf]
        %v214 = vld [vmem:[%s169 + $0xa4] sm:$0xf]
        %v215 = vld [vmem:[%s169 + $0xa8] sm:$0xf]
        %v216 = vld [vmem:[%s169 + $0xac] sm:$0xf]
        %v217 = vld [vmem:[%s169 + $0xb0] sm:$0xf]
        %v218 = vld [vmem:[%s169 + $0xb4] sm:$0xf]
        %v219 = vld [vmem:[%s169 + $0xb8] sm:$0xf]
        %v220 = vld [vmem:[%s169 + $0xbc] sm:$0xf]
        %v221 = vld [vmem:[%s169 + $0xc0] sm:$0xf]
        %v222 = vld [vmem:[%s169 + $0xc4] sm:$0xf]
        %v223 = vld [vmem:[%s169 + $0xc8] sm:$0xf]
        %v224 = vld [vmem:[%s169 + $0xcc] sm:$0xf]
        %v225 = vld [vmem:[%s169 + $0xd0] sm:$0xf]
        %v226 = vld [vmem:[%s169 + $0xd4] sm:$0xf]
        %v227 = vld [vmem:[%s169 + $0xd8] sm:$0xf]
        %v228 = vld [vmem:[%s169 + $0xdc] sm:$0xf]
        %v229 = vld [vmem:[%s169 + $0xe0] sm:$0xf]
        %v230 = vld [vmem:[%s169 + $0xe4] sm:$0xf]
        %v231 = vld [vmem:[%s169 + $0xe8] sm:$0xf]
        %v232 = vld [vmem:[%s169 + $0xec] sm:$0xf]
        %v233 = vld [vmem:[%s169 + $0xf0] sm:$0xf]
        %v234 = vld [vmem:[%s169 + $0xf4] sm:$0xf]
        %v235 = vld [vmem:[%s169 + $0xf8] sm:$0xf]
        %v236 = vld [vmem:[%s169 + $0xfc] sm:$0xf]
        %v237 = vld [vmem:[%s169 + $0x100] sm:$0xf]
        %v238 = vld [vmem:[%s169 + $0x104] sm:$0xf]
        %v239 = vld [vmem:[%s169 + $0x108] sm:$0xf]
        %v240 = vld [vmem:[%s169 + $0x10c] sm:$0xf]
        %v241 = vld [vmem:[%s169 + $0x110] sm:$0xf]
        %v242 = vld [vmem:[%s169 + $0x114] sm:$0xf]
        %v243 = vld [vmem:[%s169 + $0x118] sm:$0xf]
        %v244 = vld [vmem:[%s169 + $0x11c] sm:$0xf]
        %v245 = vld [vmem:[%s169 + $0x120] sm:$0xf]
        %v246 = vld [vmem:[%s169 + $0x124] sm:$0xf]
        %v247 = vld [vmem:[%s169 + $0x128] sm:$0xf]
        %v248 = vld [vmem:[%s169 + $0x12c] sm:$0xf]
        %v249 = vld [vmem:[%s169 + $0x130] sm:$0xf]
        %v250 = vld [vmem:[%s169 + $0x134] sm:$0xf]
        %v251 = vld [vmem:[%s169 + $0x138] sm:$0xf]
        %v252 = vld [vmem:[%s169 + $0x13c] sm:$0xf]
        %v253 = vld [vmem:[%s169 + $0x140] sm:$0xf]
        %v254 = vld [vmem:[%s169 + $0x144] sm:$0xf]
        %v255 = vld [vmem:[%s169 + $0x148] sm:$0xf]
        %v256 = vld [vmem:[%s169 + $0x14c] sm:$0xf]
        %v257 = vld [vmem:[%s169 + $0x150] sm:$0xf]
        %v258 = vld [vmem:[%s169 + $0x154] sm:$0xf]
        %v259 = vld [vmem:[%s169 + $0x158] sm:$0xf]
        %v260 = vld [vmem:[%s169 + $0x15c] sm:$0xf]
        %v261 = vld [vmem:[%s169 + $0x160] sm:$0xf]
        %v262 = vld [vmem:[%s169 + $0x164] sm:$0xf]
        %v263 = vld [vmem:[%s169 + $0x168] sm:$0xf]
        %v264 = vld [vmem:[%s169 + $0x16c] sm:$0xf]
        %v265 = vld [vmem:[%s169 + $0x170] sm:$0xf]
        %v266 = vld [vmem:[%s169 + $0x174] sm:$0xf]
        %v267 = vld [vmem:[%s169 + $0x178] sm:$0xf]
        %v268 = vld [vmem:[%s169 + $0x17c] sm:$0xf]
        %v269 = vld [vmem:[%s169 + $0x180] sm:$0xf]
        %v270 = vld [vmem:[%s169 + $0x184] sm:$0xf]
        %v271 = vld [vmem:[%s169 + $0x188] sm:$0xf]
        %v272 = vld [vmem:[%s169 + $0x18c] sm:$0xf]
        %v273 = vld [vmem:[%s169 + $0x190] sm:$0xf]
        %v274 = vld [vmem:[%s169 + $0x194] sm:$0xf]
        %v275 = vld [vmem:[%s169 + $0x198] sm:$0xf]
        %v276 = vld [vmem:[%s169 + $0x19c] sm:$0xf]
        %v277 = vld [vmem:[%s169 + $0x1a0] sm:$0xf]
        %v278 = vld [vmem:[%s169 + $0x1a4] sm:$0xf]
        %v279 = vld [vmem:[%s169 + $0x1a8] sm:$0xf]
        %v280 = vld [vmem:[%s169 + $0x1ac] sm:$0xf]
        %v281 = vld [vmem:[%s169 + $0x1b0] sm:$0xf]
        %v282 = vld [vmem:[%s169 + $0x1b4] sm:$0xf]
        %v283 = vld [vmem:[%s169 + $0x1b8] sm:$0xf]
        %v284 = vld [vmem:[%s169 + $0x1bc] sm:$0xf]
        %v285 = vld [vmem:[%s169 + $0x1c0] sm:$0xf]
        %v286 = vld [vmem:[%s169 + $0x1c4] sm:$0xf]
        %v287 = vld [vmem:[%s169 + $0x1c8] sm:$0xf]
        %v288 = vld [vmem:[%s169 + $0x1cc] sm:$0xf]
        %v289 = vld [vmem:[%s169 + $0x1d0] sm:$0xf]
        %v290 = vld [vmem:[%s169 + $0x1d4] sm:$0xf]
        %v291 = vld [vmem:[%s169 + $0x1d8] sm:$0xf]
        %v292 = vld [vmem:[%s169 + $0x1dc] sm:$0xf]
        %v293 = vld [vmem:[%s169 + $0x1e0] sm:$0xf]
        %v294 = vld [vmem:[%s169 + $0x1e4] sm:$0xf]
        %v295 = vld [vmem:[%s169 + $0x1e8] sm:$0xf]
        %v296 = vld [vmem:[%s169 + $0x1ec] sm:$0xf]
        %v297 = vld [vmem:[%s169 + $0x1f0] sm:$0xf]
        %v298 = vld [vmem:[%s169 + $0x1f4] sm:$0xf]
        %v299 = vld [vmem:[%s169 + $0x1f8] sm:$0xf]
        %v300 = vld [vmem:[%s169 + $0x1fc] sm:$0xf]
        %v301 = vld [vmem:[%s1] sm:$0xf]
        %v302 = vld [vmem:[%s1 + $0x4] sm:$0xf]
        %v303 = vld [vmem:[%s1 + $0x8] sm:$0xf]
        %v304 = vld [vmem:[%s1 + $0xc] sm:$0x3]
        %v305 = vld [vmem:[%s2] sm:$0x1]
        %v307 = vperm.slane %v305, 0
        %v437 = vunpack.c.l.b16 %v173
        %v438 = vunpack.c.l.b16 %v174
        %v439 = vunpack.c.l.b16 %v175
        %v440 = vunpack.c.l.b16 %v176
        %v441 = vunpack.c.l.b16 %v177
        %v442 = vunpack.c.l.b16 %v178
        %v443 = vunpack.c.l.b16 %v179
        %v444 = vunpack.c.l.b16 %v180
        %v445 = vunpack.c.l.b16 %v181
        %v446 = vunpack.c.l.b16 %v182
        %v447 = vunpack.c.l.b16 %v183
        %v448 = vunpack.c.l.b16 %v184
        %v449 = vunpack.c.l.b16 %v185
        %v450 = vunpack.c.l.b16 %v186
        %v451 = vunpack.c.l.b16 %v187
        %v452 = vunpack.c.l.b16 %v188
        %v453 = vunpack.c.l.b16 %v189
        %v454 = vunpack.c.l.b16 %v190
        %v455 = vunpack.c.l.b16 %v191
        %v456 = vunpack.c.l.b16 %v192
        %v457 = vunpack.c.l.b16 %v193
        %v458 = vunpack.c.l.b16 %v194
        %v459 = vunpack.c.l.b16 %v195
        %v460 = vunpack.c.l.b16 %v196
        %v461 = vunpack.c.l.b16 %v197
        %v462 = vunpack.c.l.b16 %v198
        %v463 = vunpack.c.l.b16 %v199
        %v464 = vunpack.c.l.b16 %v200
        %v465 = vunpack.c.l.b16 %v201
        %v466 = vunpack.c.l.b16 %v202
        %v467 = vunpack.c.l.b16 %v203
        %v468 = vunpack.c.l.b16 %v204
        %v469 = vunpack.c.l.b16 %v205
        %v470 = vunpack.c.l.b16 %v206
        %v471 = vunpack.c.l.b16 %v207
        %v472 = vunpack.c.l.b16 %v208
        %v473 = vunpack.c.l.b16 %v209
        %v474 = vunpack.c.l.b16 %v210
        %v475 = vunpack.c.l.b16 %v211
        %v476 = vunpack.c.l.b16 %v212
        %v477 = vunpack.c.l.b16 %v213
        %v478 = vunpack.c.l.b16 %v214
        %v479 = vunpack.c.l.b16 %v215
        %v480 = vunpack.c.l.b16 %v216
        %v481 = vunpack.c.l.b16 %v217
        %v482 = vunpack.c.l.b16 %v218
        %v483 = vunpack.c.l.b16 %v219
        %v484 = vunpack.c.l.b16 %v220
        %v485 = vunpack.c.l.b16 %v221
        %v486 = vunpack.c.l.b16 %v222
        %v487 = vunpack.c.l.b16 %v223
        %v488 = vunpack.c.l.b16 %v224
        %v489 = vunpack.c.l.b16 %v225
        %v490 = vunpack.c.l.b16 %v226
        %v491 = vunpack.c.l.b16 %v227
        %v492 = vunpack.c.l.b16 %v228
        %v493 = vunpack.c.l.b16 %v229
        %v494 = vunpack.c.l.b16 %v230
        %v495 = vunpack.c.l.b16 %v231
        %v496 = vunpack.c.l.b16 %v232
        %v497 = vunpack.c.l.b16 %v233
        %v498 = vunpack.c.l.b16 %v234
        %v499 = vunpack.c.l.b16 %v235
        %v500 = vunpack.c.l.b16 %v236
        %v501 = vunpack.c.l.b16 %v237
        %v502 = vunpack.c.l.b16 %v238
        %v503 = vunpack.c.l.b16 %v239
        %v504 = vunpack.c.l.b16 %v240
        %v505 = vunpack.c.l.b16 %v241
        %v506 = vunpack.c.l.b16 %v242
        %v507 = vunpack.c.l.b16 %v243
        %v508 = vunpack.c.l.b16 %v244
        %v509 = vunpack.c.l.b16 %v245
        %v510 = vunpack.c.l.b16 %v246
        %v511 = vunpack.c.l.b16 %v247
        %v512 = vunpack.c.l.b16 %v248
        %v513 = vunpack.c.l.b16 %v249
        %v514 = vunpack.c.l.b16 %v250
        %v515 = vunpack.c.l.b16 %v251
        %v516 = vunpack.c.l.b16 %v252
        %v517 = vunpack.c.l.b16 %v253
        %v518 = vunpack.c.l.b16 %v254
        %v519 = vunpack.c.l.b16 %v255
        %v520 = vunpack.c.l.b16 %v256
        %v521 = vunpack.c.l.b16 %v257
        %v522 = vunpack.c.l.b16 %v258
        %v523 = vunpack.c.l.b16 %v259
        %v524 = vunpack.c.l.b16 %v260
        %v525 = vunpack.c.l.b16 %v261
        %v526 = vunpack.c.l.b16 %v262
        %v527 = vunpack.c.l.b16 %v263
        %v528 = vunpack.c.l.b16 %v264
        %v529 = vunpack.c.l.b16 %v265
        %v530 = vunpack.c.l.b16 %v266
        %v531 = vunpack.c.l.b16 %v267
        %v532 = vunpack.c.l.b16 %v268
        %v533 = vunpack.c.l.b16 %v269
        %v534 = vunpack.c.l.b16 %v270
        %v535 = vunpack.c.l.b16 %v271
        %v536 = vunpack.c.l.b16 %v272
        %v537 = vunpack.c.l.b16 %v273
        %v538 = vunpack.c.l.b16 %v274
        %v539 = vunpack.c.l.b16 %v275
        %v540 = vunpack.c.l.b16 %v276
        %v541 = vunpack.c.l.b16 %v277
        %v542 = vunpack.c.l.b16 %v278
        %v543 = vunpack.c.l.b16 %v279
        %v544 = vunpack.c.l.b16 %v280
        %v545 = vunpack.c.l.b16 %v281
        %v546 = vunpack.c.l.b16 %v282
        %v547 = vunpack.c.l.b16 %v283
        %v548 = vunpack.c.l.b16 %v284
        %v549 = vunpack.c.l.b16 %v285
        %v550 = vunpack.c.l.b16 %v286
        %v551 = vunpack.c.l.b16 %v287
        %v552 = vunpack.c.l.b16 %v288
        %v553 = vunpack.c.l.b16 %v289
        %v554 = vunpack.c.l.b16 %v290
        %v555 = vunpack.c.l.b16 %v291
        %v556 = vunpack.c.l.b16 %v292
        %v557 = vunpack.c.l.b16 %v293
        %v558 = vunpack.c.l.b16 %v294
        %v559 = vunpack.c.l.b16 %v295
        %v560 = vunpack.c.l.b16 %v296
        %v561 = vunpack.c.l.b16 %v297
        %v562 = vunpack.c.l.b16 %v298
        %v563 = vunpack.c.l.b16 %v299
        %v564 = vunpack.c.l.b16 %v300
        %v565 = vpack.c.b16 %v438, %v437
        %v566 = vpack.c.b16 %v440, %v439
        %v567 = vpack.c.b16 %v442, %v441
        %v568 = vpack.c.b16 %v444, %v443
        %v569 = vpack.c.b16 %v446, %v445
        %v570 = vpack.c.b16 %v448, %v447
        %v571 = vpack.c.b16 %v450, %v449
        %v572 = vpack.c.b16 %v452, %v451
        %v573 = vpack.c.b16 %v454, %v453
        %v574 = vpack.c.b16 %v456, %v455
        %v575 = vpack.c.b16 %v458, %v457
        %v576 = vpack.c.b16 %v460, %v459
        %v577 = vpack.c.b16 %v462, %v461
        %v578 = vpack.c.b16 %v464, %v463
        %v579 = vpack.c.b16 %v466, %v465
        %v580 = vpack.c.b16 %v468, %v467
        %v581 = vpack.c.b16 %v470, %v469
        %v582 = vpack.c.b16 %v472, %v471
        %v583 = vpack.c.b16 %v474, %v473
        %v584 = vpack.c.b16 %v476, %v475
        %v585 = vpack.c.b16 %v478, %v477
        %v586 = vpack.c.b16 %v480, %v479
        %v587 = vpack.c.b16 %v482, %v481
        %v588 = vpack.c.b16 %v484, %v483
        %v589 = vpack.c.b16 %v486, %v485
        %v590 = vpack.c.b16 %v488, %v487
        %v591 = vpack.c.b16 %v490, %v489
        %v592 = vpack.c.b16 %v492, %v491
        %v593 = vpack.c.b16 %v494, %v493
        %v594 = vpack.c.b16 %v496, %v495
        %v595 = vpack.c.b16 %v498, %v497
        %v596 = vpack.c.b16 %v500, %v499
        %v597 = vpack.c.b16 %v502, %v501
        %v598 = vpack.c.b16 %v504, %v503
        %v599 = vpack.c.b16 %v506, %v505
        %v600 = vpack.c.b16 %v508, %v507
        %v601 = vpack.c.b16 %v510, %v509
        %v602 = vpack.c.b16 %v512, %v511
        %v603 = vpack.c.b16 %v514, %v513
        %v604 = vpack.c.b16 %v516, %v515
        %v605 = vpack.c.b16 %v518, %v517
        %v606 = vpack.c.b16 %v520, %v519
        %v607 = vpack.c.b16 %v522, %v521
        %v608 = vpack.c.b16 %v524, %v523
        %v609 = vpack.c.b16 %v526, %v525
        %v610 = vpack.c.b16 %v528, %v527
        %v611 = vpack.c.b16 %v530, %v529
        %v612 = vpack.c.b16 %v532, %v531
        %v613 = vpack.c.b16 %v534, %v533
        %v614 = vpack.c.b16 %v536, %v535
        %v615 = vpack.c.b16 %v538, %v537
        %v616 = vpack.c.b16 %v540, %v539
        %v617 = vpack.c.b16 %v542, %v541
        %v618 = vpack.c.b16 %v544, %v543
        %v619 = vpack.c.b16 %v546, %v545
        %v620 = vpack.c.b16 %v548, %v547
        %v621 = vpack.c.b16 %v550, %v549
        %v622 = vpack.c.b16 %v552, %v551
        %v623 = vpack.c.b16 %v554, %v553
        %v624 = vpack.c.b16 %v556, %v555
        %v625 = vpack.c.b16 %v558, %v557
        %v626 = vpack.c.b16 %v560, %v559
        %v627 = vpack.c.b16 %v562, %v561
        %v628 = vpack.c.b16 %v564, %v563
        %v633 = vunpack.c.l.b16 %v301
        %v634 = vunpack.c.l.b16 %v302
        %v635 = vunpack.c.l.b16 %v303
        %v636 = vunpack.c.l.b16 %v304
        %v637 = vpack.c.b16 %v634, %v633
        %v638 = vpack.c.b16 %v636, %v635
        %vm640 = vcmask 220160
        %v642 = vsel %vm640, %v565, 0
        %v645 = vsel %vm640, %v566, 0
        %v648 = vsel %vm640, %v567, 0
        %v651 = vsel %vm640, %v568, 0
        %v654 = vsel %vm640, %v569, 0
        %v657 = vsel %vm640, %v570, 0
        %v660 = vsel %vm640, %v571, 0
        %v663 = vsel %vm640, %v572, 0
        %v666 = vsel %vm640, %v573, 0
        %v669 = vsel %vm640, %v574, 0
        %v672 = vsel %vm640, %v575, 0
        %v675 = vsel %vm640, %v576, 0
        %v678 = vsel %vm640, %v577, 0
        %v681 = vsel %vm640, %v578, 0
        %v684 = vsel %vm640, %v579, 0
        %v687 = vsel %vm640, %v580, 0
        %v690 = vsel %vm640, %v581, 0
        %v693 = vsel %vm640, %v582, 0
        %v696 = vsel %vm640, %v583, 0
        %v699 = vsel %vm640, %v584, 0
        %v702 = vsel %vm640, %v585, 0
        %v705 = vsel %vm640, %v586, 0
        %v708 = vsel %vm640, %v587, 0
        %v711 = vsel %vm640, %v588, 0
        %v714 = vsel %vm640, %v589, 0
        %v717 = vsel %vm640, %v590, 0
        %v720 = vsel %vm640, %v591, 0
        %v723 = vsel %vm640, %v592, 0
        %v726 = vsel %vm640, %v593, 0
        %v729 = vsel %vm640, %v594, 0
        %v732 = vsel %vm640, %v595, 0
        %v735 = vsel %vm640, %v596, 0
        %v738 = vsel %vm640, %v597, 0
        %v741 = vsel %vm640, %v598, 0
        %v744 = vsel %vm640, %v599, 0
        %v747 = vsel %vm640, %v600, 0
        %v750 = vsel %vm640, %v601, 0
        %v753 = vsel %vm640, %v602, 0
        %v756 = vsel %vm640, %v603, 0
        %v759 = vsel %vm640, %v604, 0
        %v762 = vsel %vm640, %v605, 0
        %v765 = vsel %vm640, %v606, 0
        %v768 = vsel %vm640, %v607, 0
        %v771 = vsel %vm640, %v608, 0
        %v774 = vsel %vm640, %v609, 0
        %v777 = vsel %vm640, %v610, 0
        %v780 = vsel %vm640, %v611, 0
        %v783 = vsel %vm640, %v612, 0
        %v786 = vsel %vm640, %v613, 0
        %v789 = vsel %vm640, %v614, 0
        %v792 = vsel %vm640, %v615, 0
        %v795 = vsel %vm640, %v616, 0
        %v798 = vsel %vm640, %v617, 0
        %v801 = vsel %vm640, %v618, 0
        %v804 = vsel %vm640, %v619, 0
        %v807 = vsel %vm640, %v620, 0
        %v810 = vsel %vm640, %v621, 0
        %v813 = vsel %vm640, %v622, 0
        %v816 = vsel %vm640, %v623, 0
        %v819 = vsel %vm640, %v624, 0
        %v822 = vsel %vm640, %v625, 0
        %v825 = vsel %vm640, %v626, 0
        %v828 = vsel %vm640, %v627, 0
        %v831 = vsel %vm640, %v628, 0
        %vm833 = vcmask 1044480
        %vm834 = vcmask 1045504
        %v835 = vsel %vm833, 4294967295, 65535
        %v836 = vsel %vm834, %v835, 0
        %v838 = vand.u32 %v638, %v836
        %840 = vmatpush.bf16.msra.mxu0 0
        %841 = vmatpush.bf16.msra.mxu0 0
        %842 = vmatpush.bf16.msra.mxu0 0
        %843 = vmatpush.bf16.msra.mxu0 0
        %844 = vmatpush.bf16.msra.mxu0 0
        %845 = vmatpush.bf16.msra.mxu0 0
        %846 = vmatpush.bf16.msra.mxu0 %v838
        %847 = vmatpush.bf16.msra.mxu0 %v637
        %848 = vmatmul.bf16.gmra.mxu0 %v642
        %v849 = vpop.f32.mrf.mxu0
        %v850 = vadd.f32 %v307, %v849
        %v851 = vpop.f32.mrf.mxu0
        %v852 = vadd.f32 %v307, %v851
        %853 = vmatmul.bf16.gmra.mxu0 %v645
        %v854 = vpop.f32.mrf.mxu0
        %v855 = vadd.f32 %v307, %v854
        %v856 = vpop.f32.mrf.mxu0
        %v857 = vadd.f32 %v307, %v856
        %858 = vmatmul.bf16.gmra.mxu0 %v648
        %v859 = vpop.f32.mrf.mxu0
        %v860 = vadd.f32 %v307, %v859
        %v861 = vpop.f32.mrf.mxu0
        %v862 = vadd.f32 %v307, %v861
        %863 = vmatmul.bf16.gmra.mxu0 %v651
        %v864 = vpop.f32.mrf.mxu0
        %v865 = vadd.f32 %v307, %v864
        %v866 = vpop.f32.mrf.mxu0
        %v867 = vadd.f32 %v307, %v866
        %868 = vmatmul.bf16.gmra.mxu0 %v654
        %v869 = vpop.f32.mrf.mxu0
        %v870 = vadd.f32 %v307, %v869
        %v871 = vpop.f32.mrf.mxu0
        %v872 = vadd.f32 %v307, %v871
        %873 = vmatmul.bf16.gmra.mxu0 %v657
        %v874 = vpop.f32.mrf.mxu0
        %v875 = vadd.f32 %v307, %v874
        %v876 = vpop.f32.mrf.mxu0
        %v877 = vadd.f32 %v307, %v876
        %878 = vmatmul.bf16.gmra.mxu0 %v660
        %v879 = vpop.f32.mrf.mxu0
        %v880 = vadd.f32 %v307, %v879
        %v881 = vpop.f32.mrf.mxu0
        %v882 = vadd.f32 %v307, %v881
        %883 = vmatmul.bf16.gmra.mxu0 %v663
        %v884 = vpop.f32.mrf.mxu0
        %v885 = vadd.f32 %v307, %v884
        %v886 = vpop.f32.mrf.mxu0
        %v887 = vadd.f32 %v307, %v886
        %888 = vmatmul.bf16.gmra.mxu0 %v666
        %v889 = vpop.f32.mrf.mxu0
        %v890 = vadd.f32 %v307, %v889
        %v891 = vpop.f32.mrf.mxu0
        %v892 = vadd.f32 %v307, %v891
        %893 = vmatmul.bf16.gmra.mxu0 %v669
        %v894 = vpop.f32.mrf.mxu0
        %v895 = vadd.f32 %v307, %v894
        %v896 = vpop.f32.mrf.mxu0
        %v897 = vadd.f32 %v307, %v896
        %898 = vmatmul.bf16.gmra.mxu0 %v672
        %v899 = vpop.f32.mrf.mxu0
        %v900 = vadd.f32 %v307, %v899
        %v901 = vpop.f32.mrf.mxu0
        %v902 = vadd.f32 %v307, %v901
        %903 = vmatmul.bf16.gmra.mxu0 %v675
        %v904 = vpop.f32.mrf.mxu0
        %v905 = vadd.f32 %v307, %v904
        %v906 = vpop.f32.mrf.mxu0
        %v907 = vadd.f32 %v307, %v906
        %908 = vmatmul.bf16.gmra.mxu0 %v678
        %v909 = vpop.f32.mrf.mxu0
        %v910 = vadd.f32 %v307, %v909
        %v911 = vpop.f32.mrf.mxu0
        %v912 = vadd.f32 %v307, %v911
        %913 = vmatmul.bf16.gmra.mxu0 %v681
        %v914 = vpop.f32.mrf.mxu0
        %v915 = vadd.f32 %v307, %v914
        %v916 = vpop.f32.mrf.mxu0
        %v917 = vadd.f32 %v307, %v916
        %918 = vmatmul.bf16.gmra.mxu0 %v684
        %v919 = vpop.f32.mrf.mxu0
        %v920 = vadd.f32 %v307, %v919
        %v921 = vpop.f32.mrf.mxu0
        %v922 = vadd.f32 %v307, %v921
        %923 = vmatmul.bf16.gmra.mxu0 %v687
        %v924 = vpop.f32.mrf.mxu0
        %v925 = vadd.f32 %v307, %v924
        %v926 = vpop.f32.mrf.mxu0
        %v927 = vadd.f32 %v307, %v926
        %928 = vmatmul.bf16.gmra.mxu0 %v690
        %v929 = vpop.f32.mrf.mxu0
        %v930 = vadd.f32 %v307, %v929
        %v931 = vpop.f32.mrf.mxu0
        %v932 = vadd.f32 %v307, %v931
        %933 = vmatmul.bf16.gmra.mxu0 %v693
        %v934 = vpop.f32.mrf.mxu0
        %v935 = vadd.f32 %v307, %v934
        %v936 = vpop.f32.mrf.mxu0
        %v937 = vadd.f32 %v307, %v936
        %938 = vmatmul.bf16.gmra.mxu0 %v696
        %v939 = vpop.f32.mrf.mxu0
        %v940 = vadd.f32 %v307, %v939
        %v941 = vpop.f32.mrf.mxu0
        %v942 = vadd.f32 %v307, %v941
        %943 = vmatmul.bf16.gmra.mxu0 %v699
        %v944 = vpop.f32.mrf.mxu0
        %v945 = vadd.f32 %v307, %v944
        %v946 = vpop.f32.mrf.mxu0
        %v947 = vadd.f32 %v307, %v946
        %948 = vmatmul.bf16.gmra.mxu0 %v702
        %v949 = vpop.f32.mrf.mxu0
        %v950 = vadd.f32 %v307, %v949
        %v951 = vpop.f32.mrf.mxu0
        %v952 = vadd.f32 %v307, %v951
        %953 = vmatmul.bf16.gmra.mxu0 %v705
        %v954 = vpop.f32.mrf.mxu0
        %v955 = vadd.f32 %v307, %v954
        %v956 = vpop.f32.mrf.mxu0
        %v957 = vadd.f32 %v307, %v956
        %958 = vmatmul.bf16.gmra.mxu0 %v708
        %v959 = vpop.f32.mrf.mxu0
        %v960 = vadd.f32 %v307, %v959
        %v961 = vpop.f32.mrf.mxu0
        %v962 = vadd.f32 %v307, %v961
        %963 = vmatmul.bf16.gmra.mxu0 %v711
        %v964 = vpop.f32.mrf.mxu0
        %v965 = vadd.f32 %v307, %v964
        %v966 = vpop.f32.mrf.mxu0
        %v967 = vadd.f32 %v307, %v966
        %968 = vmatmul.bf16.gmra.mxu0 %v714
        %v969 = vpop.f32.mrf.mxu0
        %v970 = vadd.f32 %v307, %v969
        %v971 = vpop.f32.mrf.mxu0
        %v972 = vadd.f32 %v307, %v971
        %973 = vmatmul.bf16.gmra.mxu0 %v717
        %v974 = vpop.f32.mrf.mxu0
        %v975 = vadd.f32 %v307, %v974
        %v976 = vpop.f32.mrf.mxu0
        %v977 = vadd.f32 %v307, %v976
        %978 = vmatmul.bf16.gmra.mxu0 %v720
        %v979 = vpop.f32.mrf.mxu0
        %v980 = vadd.f32 %v307, %v979
        %v981 = vpop.f32.mrf.mxu0
        %v982 = vadd.f32 %v307, %v981
        %983 = vmatmul.bf16.gmra.mxu0 %v723
        %v984 = vpop.f32.mrf.mxu0
        %v985 = vadd.f32 %v307, %v984
        %v986 = vpop.f32.mrf.mxu0
        %v987 = vadd.f32 %v307, %v986
        %988 = vmatmul.bf16.gmra.mxu0 %v726
        %v989 = vpop.f32.mrf.mxu0
        %v990 = vadd.f32 %v307, %v989
        %v991 = vpop.f32.mrf.mxu0
        %v992 = vadd.f32 %v307, %v991
        %993 = vmatmul.bf16.gmra.mxu0 %v729
        %v994 = vpop.f32.mrf.mxu0
        %v995 = vadd.f32 %v307, %v994
        %v996 = vpop.f32.mrf.mxu0
        %v997 = vadd.f32 %v307, %v996
        %998 = vmatmul.bf16.gmra.mxu0 %v732
        %v999 = vpop.f32.mrf.mxu0
        %v1000 = vadd.f32 %v307, %v999
        %v1001 = vpop.f32.mrf.mxu0
        %v1002 = vadd.f32 %v307, %v1001
        %1003 = vmatmul.bf16.gmra.mxu0 %v735
        %v1004 = vpop.f32.mrf.mxu0
        %v1005 = vadd.f32 %v307, %v1004
        %v1006 = vpop.f32.mrf.mxu0
        %v1007 = vadd.f32 %v307, %v1006
        %1008 = vmatmul.bf16.gmra.mxu0 %v738
        %v1009 = vpop.f32.mrf.mxu0
        %v1010 = vadd.f32 %v307, %v1009
        %v1011 = vpop.f32.mrf.mxu0
        %v1012 = vadd.f32 %v307, %v1011
        %1013 = vmatmul.bf16.gmra.mxu0 %v741
        %v1014 = vpop.f32.mrf.mxu0
        %v1015 = vadd.f32 %v307, %v1014
        %v1016 = vpop.f32.mrf.mxu0
        %v1017 = vadd.f32 %v307, %v1016
        %1018 = vmatmul.bf16.gmra.mxu0 %v744
        %v1019 = vpop.f32.mrf.mxu0
        %v1020 = vadd.f32 %v307, %v1019
        %v1021 = vpop.f32.mrf.mxu0
        %v1022 = vadd.f32 %v307, %v1021
        %1023 = vmatmul.bf16.gmra.mxu0 %v747
        %v1024 = vpop.f32.mrf.mxu0
        %v1025 = vadd.f32 %v307, %v1024
        %v1026 = vpop.f32.mrf.mxu0
        %v1027 = vadd.f32 %v307, %v1026
        %1028 = vmatmul.bf16.gmra.mxu0 %v750
        %v1029 = vpop.f32.mrf.mxu0
        %v1030 = vadd.f32 %v307, %v1029
        %v1031 = vpop.f32.mrf.mxu0
        %v1032 = vadd.f32 %v307, %v1031
        %1033 = vmatmul.bf16.gmra.mxu0 %v753
        %v1034 = vpop.f32.mrf.mxu0
        %v1035 = vadd.f32 %v307, %v1034
        %v1036 = vpop.f32.mrf.mxu0
        %v1037 = vadd.f32 %v307, %v1036
        %1038 = vmatmul.bf16.gmra.mxu0 %v756
        %v1039 = vpop.f32.mrf.mxu0
        %v1040 = vadd.f32 %v307, %v1039
        %v1041 = vpop.f32.mrf.mxu0
        %v1042 = vadd.f32 %v307, %v1041
        %1043 = vmatmul.bf16.gmra.mxu0 %v759
        %v1044 = vpop.f32.mrf.mxu0
        %v1045 = vadd.f32 %v307, %v1044
        %v1046 = vpop.f32.mrf.mxu0
        %v1047 = vadd.f32 %v307, %v1046
        %1048 = vmatmul.bf16.gmra.mxu0 %v762
        %v1049 = vpop.f32.mrf.mxu0
        %v1050 = vadd.f32 %v307, %v1049
        %v1051 = vpop.f32.mrf.mxu0
        %v1052 = vadd.f32 %v307, %v1051
        %1053 = vmatmul.bf16.gmra.mxu0 %v765
        %v1054 = vpop.f32.mrf.mxu0
        %v1055 = vadd.f32 %v307, %v1054
        %v1056 = vpop.f32.mrf.mxu0
        %v1057 = vadd.f32 %v307, %v1056
        %1058 = vmatmul.bf16.gmra.mxu0 %v768
        %v1059 = vpop.f32.mrf.mxu0
        %v1060 = vadd.f32 %v307, %v1059
        %v1061 = vpop.f32.mrf.mxu0
        %v1062 = vadd.f32 %v307, %v1061
        %1063 = vmatmul.bf16.gmra.mxu0 %v771
        %v1064 = vpop.f32.mrf.mxu0
        %v1065 = vadd.f32 %v307, %v1064
        %v1066 = vpop.f32.mrf.mxu0
        %v1067 = vadd.f32 %v307, %v1066
        %1068 = vmatmul.bf16.gmra.mxu0 %v774
        %v1069 = vpop.f32.mrf.mxu0
        %v1070 = vadd.f32 %v307, %v1069
        %v1071 = vpop.f32.mrf.mxu0
        %v1072 = vadd.f32 %v307, %v1071
        %1073 = vmatmul.bf16.gmra.mxu0 %v777
        %v1074 = vpop.f32.mrf.mxu0
        %v1075 = vadd.f32 %v307, %v1074
        %v1076 = vpop.f32.mrf.mxu0
        %v1077 = vadd.f32 %v307, %v1076
        %1078 = vmatmul.bf16.gmra.mxu0 %v780
        %v1079 = vpop.f32.mrf.mxu0
        %v1080 = vadd.f32 %v307, %v1079
        %v1081 = vpop.f32.mrf.mxu0
        %v1082 = vadd.f32 %v307, %v1081
        %1083 = vmatmul.bf16.gmra.mxu0 %v783
        %v1084 = vpop.f32.mrf.mxu0
        %v1085 = vadd.f32 %v307, %v1084
        %v1086 = vpop.f32.mrf.mxu0
        %v1087 = vadd.f32 %v307, %v1086
        %1088 = vmatmul.bf16.gmra.mxu0 %v786
        %v1089 = vpop.f32.mrf.mxu0
        %v1090 = vadd.f32 %v307, %v1089
        %v1091 = vpop.f32.mrf.mxu0
        %v1092 = vadd.f32 %v307, %v1091
        %1093 = vmatmul.bf16.gmra.mxu0 %v789
        %v1094 = vpop.f32.mrf.mxu0
        %v1095 = vadd.f32 %v307, %v1094
        %v1096 = vpop.f32.mrf.mxu0
        %v1097 = vadd.f32 %v307, %v1096
        %1098 = vmatmul.bf16.gmra.mxu0 %v792
        %v1099 = vpop.f32.mrf.mxu0
        %v1100 = vadd.f32 %v307, %v1099
        %v1101 = vpop.f32.mrf.mxu0
        %v1102 = vadd.f32 %v307, %v1101
        %1103 = vmatmul.bf16.gmra.mxu0 %v795
        %v1104 = vpop.f32.mrf.mxu0
        %v1105 = vadd.f32 %v307, %v1104
        %v1106 = vpop.f32.mrf.mxu0
        %v1107 = vadd.f32 %v307, %v1106
        %1108 = vmatmul.bf16.gmra.mxu0 %v798
        %v1109 = vpop.f32.mrf.mxu0
        %v1110 = vadd.f32 %v307, %v1109
        %v1111 = vpop.f32.mrf.mxu0
        %v1112 = vadd.f32 %v307, %v1111
        %1113 = vmatmul.bf16.gmra.mxu0 %v801
        %v1114 = vpop.f32.mrf.mxu0
        %v1115 = vadd.f32 %v307, %v1114
        %v1116 = vpop.f32.mrf.mxu0
        %v1117 = vadd.f32 %v307, %v1116
        %1118 = vmatmul.bf16.gmra.mxu0 %v804
        %v1119 = vpop.f32.mrf.mxu0
        %v1120 = vadd.f32 %v307, %v1119
        %v1121 = vpop.f32.mrf.mxu0
        %v1122 = vadd.f32 %v307, %v1121
        %1123 = vmatmul.bf16.gmra.mxu0 %v807
        %v1124 = vpop.f32.mrf.mxu0
        %v1125 = vadd.f32 %v307, %v1124
        %v1126 = vpop.f32.mrf.mxu0
        %v1127 = vadd.f32 %v307, %v1126
        %1128 = vmatmul.bf16.gmra.mxu0 %v810
        %v1129 = vpop.f32.mrf.mxu0
        %v1130 = vadd.f32 %v307, %v1129
        %v1131 = vpop.f32.mrf.mxu0
        %v1132 = vadd.f32 %v307, %v1131
        %1133 = vmatmul.bf16.gmra.mxu0 %v813
        %v1134 = vpop.f32.mrf.mxu0
        %v1135 = vadd.f32 %v307, %v1134
        %v1136 = vpop.f32.mrf.mxu0
        %v1137 = vadd.f32 %v307, %v1136
        %1138 = vmatmul.bf16.gmra.mxu0 %v816
        %v1139 = vpop.f32.mrf.mxu0
        %v1140 = vadd.f32 %v307, %v1139
        %v1141 = vpop.f32.mrf.mxu0
        %v1142 = vadd.f32 %v307, %v1141
        %1143 = vmatmul.bf16.gmra.mxu0 %v819
        %v1144 = vpop.f32.mrf.mxu0
        %v1145 = vadd.f32 %v307, %v1144
        %v1146 = vpop.f32.mrf.mxu0
        %v1147 = vadd.f32 %v307, %v1146
        %1148 = vmatmul.bf16.gmra.mxu0 %v822
        %v1149 = vpop.f32.mrf.mxu0
        %v1150 = vadd.f32 %v307, %v1149
        %v1151 = vpop.f32.mrf.mxu0
        %v1152 = vadd.f32 %v307, %v1151
        %1153 = vmatmul.bf16.gmra.mxu0 %v825
        %v1154 = vpop.f32.mrf.mxu0
        %v1155 = vadd.f32 %v307, %v1154
        %v1156 = vpop.f32.mrf.mxu0
        %v1157 = vadd.f32 %v307, %v1156
        %1158 = vmatmul.bf16.gmra.mxu0 %v828
        %v1159 = vpop.f32.mrf.mxu0
        %v1160 = vadd.f32 %v307, %v1159
        %v1161 = vpop.f32.mrf.mxu0
        %v1162 = vadd.f32 %v307, %v1161
        %1163 = vmatmul.bf16.gmra.mxu0 %v831
        %v1164 = vpop.f32.mrf.mxu0
        %v1165 = vadd.f32 %v307, %v1164
        %v1166 = vpop.f32.mrf.mxu0
        %v1167 = vadd.f32 %v307, %v1166
        %1168 = vdwg.mxu0
        %vm1169 = vcmp.gt.f32.partialorder %v850, 0.0
        %vm1170 = vcmp.gt.f32.partialorder %v852, 0.0
        %vm1171 = vcmp.gt.f32.partialorder %v855, 0.0
        %vm1172 = vcmp.gt.f32.partialorder %v857, 0.0
        %vm1173 = vcmp.gt.f32.partialorder %v860, 0.0
        %vm1174 = vcmp.gt.f32.partialorder %v862, 0.0
        %vm1175 = vcmp.gt.f32.partialorder %v865, 0.0
        %vm1176 = vcmp.gt.f32.partialorder %v867, 0.0
        %vm1177 = vcmp.gt.f32.partialorder %v870, 0.0
        %vm1178 = vcmp.gt.f32.partialorder %v872, 0.0
        %vm1179 = vcmp.gt.f32.partialorder %v875, 0.0
        %vm1180 = vcmp.gt.f32.partialorder %v877, 0.0
        %vm1181 = vcmp.gt.f32.partialorder %v880, 0.0
        %vm1182 = vcmp.gt.f32.partialorder %v882, 0.0
        %vm1183 = vcmp.gt.f32.partialorder %v885, 0.0
        %vm1184 = vcmp.gt.f32.partialorder %v887, 0.0
        %vm1185 = vcmp.gt.f32.partialorder %v890, 0.0
        %vm1186 = vcmp.gt.f32.partialorder %v892, 0.0
        %vm1187 = vcmp.gt.f32.partialorder %v895, 0.0
        %vm1188 = vcmp.gt.f32.partialorder %v897, 0.0
        %vm1189 = vcmp.gt.f32.partialorder %v900, 0.0
        %vm1190 = vcmp.gt.f32.partialorder %v902, 0.0
        %vm1191 = vcmp.gt.f32.partialorder %v905, 0.0
        %vm1192 = vcmp.gt.f32.partialorder %v907, 0.0
        %vm1193 = vcmp.gt.f32.partialorder %v910, 0.0
        %vm1194 = vcmp.gt.f32.partialorder %v912, 0.0
        %vm1195 = vcmp.gt.f32.partialorder %v915, 0.0
        %vm1196 = vcmp.gt.f32.partialorder %v917, 0.0
        %vm1197 = vcmp.gt.f32.partialorder %v920, 0.0
        %vm1198 = vcmp.gt.f32.partialorder %v922, 0.0
        %vm1199 = vcmp.gt.f32.partialorder %v925, 0.0
        %vm1200 = vcmp.gt.f32.partialorder %v927, 0.0
        %vm1201 = vcmp.gt.f32.partialorder %v930, 0.0
        %vm1202 = vcmp.gt.f32.partialorder %v932, 0.0
        %vm1203 = vcmp.gt.f32.partialorder %v935, 0.0
        %vm1204 = vcmp.gt.f32.partialorder %v937, 0.0
        %vm1205 = vcmp.gt.f32.partialorder %v940, 0.0
        %vm1206 = vcmp.gt.f32.partialorder %v942, 0.0
        %vm1207 = vcmp.gt.f32.partialorder %v945, 0.0
        %vm1208 = vcmp.gt.f32.partialorder %v947, 0.0
        %vm1209 = vcmp.gt.f32.partialorder %v950, 0.0
        %vm1210 = vcmp.gt.f32.partialorder %v952, 0.0
        %vm1211 = vcmp.gt.f32.partialorder %v955, 0.0
        %vm1212 = vcmp.gt.f32.partialorder %v957, 0.0
        %vm1213 = vcmp.gt.f32.partialorder %v960, 0.0
        %vm1214 = vcmp.gt.f32.partialorder %v962, 0.0
        %vm1215 = vcmp.gt.f32.partialorder %v965, 0.0
        %vm1216 = vcmp.gt.f32.partialorder %v967, 0.0
        %vm1217 = vcmp.gt.f32.partialorder %v970, 0.0
        %vm1218 = vcmp.gt.f32.partialorder %v972, 0.0
        %vm1219 = vcmp.gt.f32.partialorder %v975, 0.0
        %vm1220 = vcmp.gt.f32.partialorder %v977, 0.0
        %vm1221 = vcmp.gt.f32.partialorder %v980, 0.0
        %vm1222 = vcmp.gt.f32.partialorder %v982, 0.0
        %vm1223 = vcmp.gt.f32.partialorder %v985, 0.0
        %vm1224 = vcmp.gt.f32.partialorder %v987, 0.0
        %vm1225 = vcmp.gt.f32.partialorder %v990, 0.0
        %vm1226 = vcmp.gt.f32.partialorder %v992, 0.0
        %vm1227 = vcmp.gt.f32.partialorder %v995, 0.0
        %vm1228 = vcmp.gt.f32.partialorder %v997, 0.0
        %vm1229 = vcmp.gt.f32.partialorder %v1000, 0.0
        %vm1230 = vcmp.gt.f32.partialorder %v1002, 0.0
        %vm1231 = vcmp.gt.f32.partialorder %v1005, 0.0
        %vm1232 = vcmp.gt.f32.partialorder %v1007, 0.0
        %vm1233 = vcmp.gt.f32.partialorder %v1010, 0.0
        %vm1234 = vcmp.gt.f32.partialorder %v1012, 0.0
        %vm1235 = vcmp.gt.f32.partialorder %v1015, 0.0
        %vm1236 = vcmp.gt.f32.partialorder %v1017, 0.0
        %vm1237 = vcmp.gt.f32.partialorder %v1020, 0.0
        %vm1238 = vcmp.gt.f32.partialorder %v1022, 0.0
        %vm1239 = vcmp.gt.f32.partialorder %v1025, 0.0
        %vm1240 = vcmp.gt.f32.partialorder %v1027, 0.0
        %vm1241 = vcmp.gt.f32.partialorder %v1030, 0.0
        %vm1242 = vcmp.gt.f32.partialorder %v1032, 0.0
        %vm1243 = vcmp.gt.f32.partialorder %v1035, 0.0
        %vm1244 = vcmp.gt.f32.partialorder %v1037, 0.0
        %vm1245 = vcmp.gt.f32.partialorder %v1040, 0.0
        %vm1246 = vcmp.gt.f32.partialorder %v1042, 0.0
        %vm1247 = vcmp.gt.f32.partialorder %v1045, 0.0
        %vm1248 = vcmp.gt.f32.partialorder %v1047, 0.0
        %vm1249 = vcmp.gt.f32.partialorder %v1050, 0.0
        %vm1250 = vcmp.gt.f32.partialorder %v1052, 0.0
        %vm1251 = vcmp.gt.f32.partialorder %v1055, 0.0
        %vm1252 = vcmp.gt.f32.partialorder %v1057, 0.0
        %vm1253 = vcmp.gt.f32.partialorder %v1060, 0.0
        %vm1254 = vcmp.gt.f32.partialorder %v1062, 0.0
        %vm1255 = vcmp.gt.f32.partialorder %v1065, 0.0
        %vm1256 = vcmp.gt.f32.partialorder %v1067, 0.0
        %vm1257 = vcmp.gt.f32.partialorder %v1070, 0.0
        %vm1258 = vcmp.gt.f32.partialorder %v1072, 0.0
        %vm1259 = vcmp.gt.f32.partialorder %v1075, 0.0
        %vm1260 = vcmp.gt.f32.partialorder %v1077, 0.0
        %vm1261 = vcmp.gt.f32.partialorder %v1080, 0.0
        %vm1262 = vcmp.gt.f32.partialorder %v1082, 0.0
        %vm1263 = vcmp.gt.f32.partialorder %v1085, 0.0
        %vm1264 = vcmp.gt.f32.partialorder %v1087, 0.0
        %vm1265 = vcmp.gt.f32.partialorder %v1090, 0.0
        %vm1266 = vcmp.gt.f32.partialorder %v1092, 0.0
        %vm1267 = vcmp.gt.f32.partialorder %v1095, 0.0
        %vm1268 = vcmp.gt.f32.partialorder %v1097, 0.0
        %vm1269 = vcmp.gt.f32.partialorder %v1100, 0.0
        %vm1270 = vcmp.gt.f32.partialorder %v1102, 0.0
        %vm1271 = vcmp.gt.f32.partialorder %v1105, 0.0
        %vm1272 = vcmp.gt.f32.partialorder %v1107, 0.0
        %vm1273 = vcmp.gt.f32.partialorder %v1110, 0.0
        %vm1274 = vcmp.gt.f32.partialorder %v1112, 0.0
        %vm1275 = vcmp.gt.f32.partialorder %v1115, 0.0
        %vm1276 = vcmp.gt.f32.partialorder %v1117, 0.0
        %vm1277 = vcmp.gt.f32.partialorder %v1120, 0.0
        %vm1278 = vcmp.gt.f32.partialorder %v1122, 0.0
        %vm1279 = vcmp.gt.f32.partialorder %v1125, 0.0
        %vm1280 = vcmp.gt.f32.partialorder %v1127, 0.0
        %vm1281 = vcmp.gt.f32.partialorder %v1130, 0.0
        %vm1282 = vcmp.gt.f32.partialorder %v1132, 0.0
        %vm1283 = vcmp.gt.f32.partialorder %v1135, 0.0
        %vm1284 = vcmp.gt.f32.partialorder %v1137, 0.0
        %vm1285 = vcmp.gt.f32.partialorder %v1140, 0.0
        %vm1286 = vcmp.gt.f32.partialorder %v1142, 0.0
        %vm1287 = vcmp.gt.f32.partialorder %v1145, 0.0
        %vm1288 = vcmp.gt.f32.partialorder %v1147, 0.0
        %vm1289 = vcmp.gt.f32.partialorder %v1150, 0.0
        %vm1290 = vcmp.gt.f32.partialorder %v1152, 0.0
        %vm1291 = vcmp.gt.f32.partialorder %v1155, 0.0
        %vm1292 = vcmp.gt.f32.partialorder %v1157, 0.0
        %vm1293 = vcmp.gt.f32.partialorder %v1160, 0.0
        %vm1294 = vcmp.gt.f32.partialorder %v1162, 0.0
        %vm1295 = vcmp.gt.f32.partialorder %v1165, 0.0
        %vm1296 = vcmp.gt.f32.partialorder %v1167, 0.0
        %v1297 = vmul.f32 %v850, 0.1
        %v1298 = vmul.f32 %v852, 0.1
        %v1299 = vmul.f32 %v855, 0.1
        %v1300 = vmul.f32 %v857, 0.1
        %v1301 = vmul.f32 %v860, 0.1
        %v1302 = vmul.f32 %v862, 0.1
        %v1303 = vmul.f32 %v865, 0.1
        %v1304 = vmul.f32 %v867, 0.1
        %v1305 = vmul.f32 %v870, 0.1
        %v1306 = vmul.f32 %v872, 0.1
        %v1307 = vmul.f32 %v875, 0.1
        %v1308 = vmul.f32 %v877, 0.1
        %v1309 = vmul.f32 %v880, 0.1
        %v1310 = vmul.f32 %v882, 0.1
        %v1311 = vmul.f32 %v885, 0.1
        %v1312 = vmul.f32 %v887, 0.1
        %v1313 = vmul.f32 %v890, 0.1
        %v1314 = vmul.f32 %v892, 0.1
        %v1315 = vmul.f32 %v895, 0.1
        %v1316 = vmul.f32 %v897, 0.1
        %v1317 = vmul.f32 %v900, 0.1
        %v1318 = vmul.f32 %v902, 0.1
        %v1319 = vmul.f32 %v905, 0.1
        %v1320 = vmul.f32 %v907, 0.1
        %v1321 = vmul.f32 %v910, 0.1
        %v1322 = vmul.f32 %v912, 0.1
        %v1323 = vmul.f32 %v915, 0.1
        %v1324 = vmul.f32 %v917, 0.1
        %v1325 = vmul.f32 %v920, 0.1
        %v1326 = vmul.f32 %v922, 0.1
        %v1327 = vmul.f32 %v925, 0.1
        %v1328 = vmul.f32 %v927, 0.1
        %v1329 = vmul.f32 %v930, 0.1
        %v1330 = vmul.f32 %v932, 0.1
        %v1331 = vmul.f32 %v935, 0.1
        %v1332 = vmul.f32 %v937, 0.1
        %v1333 = vmul.f32 %v940, 0.1
        %v1334 = vmul.f32 %v942, 0.1
        %v1335 = vmul.f32 %v945, 0.1
        %v1336 = vmul.f32 %v947, 0.1
        %v1337 = vmul.f32 %v950, 0.1
        %v1338 = vmul.f32 %v952, 0.1
        %v1339 = vmul.f32 %v955, 0.1
        %v1340 = vmul.f32 %v957, 0.1
        %v1341 = vmul.f32 %v960, 0.1
        %v1342 = vmul.f32 %v962, 0.1
        %v1343 = vmul.f32 %v965, 0.1
        %v1344 = vmul.f32 %v967, 0.1
        %v1345 = vmul.f32 %v970, 0.1
        %v1346 = vmul.f32 %v972, 0.1
        %v1347 = vmul.f32 %v975, 0.1
        %v1348 = vmul.f32 %v977, 0.1
        %v1349 = vmul.f32 %v980, 0.1
        %v1350 = vmul.f32 %v982, 0.1
        %v1351 = vmul.f32 %v985, 0.1
        %v1352 = vmul.f32 %v987, 0.1
        %v1353 = vmul.f32 %v990, 0.1
        %v1354 = vmul.f32 %v992, 0.1
        %v1355 = vmul.f32 %v995, 0.1
        %v1356 = vmul.f32 %v997, 0.1
        %v1357 = vmul.f32 %v1000, 0.1
        %v1358 = vmul.f32 %v1002, 0.1
        %v1359 = vmul.f32 %v1005, 0.1
        %v1360 = vmul.f32 %v1007, 0.1
        %v1361 = vmul.f32 %v1010, 0.1
        %v1362 = vmul.f32 %v1012, 0.1
        %v1363 = vmul.f32 %v1015, 0.1
        %v1364 = vmul.f32 %v1017, 0.1
        %v1365 = vmul.f32 %v1020, 0.1
        %v1366 = vmul.f32 %v1022, 0.1
        %v1367 = vmul.f32 %v1025, 0.1
        %v1368 = vmul.f32 %v1027, 0.1
        %v1369 = vmul.f32 %v1030, 0.1
        %v1370 = vmul.f32 %v1032, 0.1
        %v1371 = vmul.f32 %v1035, 0.1
        %v1372 = vmul.f32 %v1037, 0.1
        %v1373 = vmul.f32 %v1040, 0.1
        %v1374 = vmul.f32 %v1042, 0.1
        %v1375 = vmul.f32 %v1045, 0.1
        %v1376 = vmul.f32 %v1047, 0.1
        %v1377 = vmul.f32 %v1050, 0.1
        %v1378 = vmul.f32 %v1052, 0.1
        %v1379 = vmul.f32 %v1055, 0.1
        %v1380 = vmul.f32 %v1057, 0.1
        %v1381 = vmul.f32 %v1060, 0.1
        %v1382 = vmul.f32 %v1062, 0.1
        %v1383 = vmul.f32 %v1065, 0.1
        %v1384 = vmul.f32 %v1067, 0.1
        %v1385 = vmul.f32 %v1070, 0.1
        %v1386 = vmul.f32 %v1072, 0.1
        %v1387 = vmul.f32 %v1075, 0.1
        %v1388 = vmul.f32 %v1077, 0.1
        %v1389 = vmul.f32 %v1080, 0.1
        %v1390 = vmul.f32 %v1082, 0.1
        %v1391 = vmul.f32 %v1085, 0.1
        %v1392 = vmul.f32 %v1087, 0.1
        %v1393 = vmul.f32 %v1090, 0.1
        %v1394 = vmul.f32 %v1092, 0.1
        %v1395 = vmul.f32 %v1095, 0.1
        %v1396 = vmul.f32 %v1097, 0.1
        %v1397 = vmul.f32 %v1100, 0.1
        %v1398 = vmul.f32 %v1102, 0.1
        %v1399 = vmul.f32 %v1105, 0.1
        %v1400 = vmul.f32 %v1107, 0.1
        %v1401 = vmul.f32 %v1110, 0.1
        %v1402 = vmul.f32 %v1112, 0.1
        %v1403 = vmul.f32 %v1115, 0.1
        %v1404 = vmul.f32 %v1117, 0.1
        %v1405 = vmul.f32 %v1120, 0.1
        %v1406 = vmul.f32 %v1122, 0.1
        %v1407 = vmul.f32 %v1125, 0.1
        %v1408 = vmul.f32 %v1127, 0.1
        %v1409 = vmul.f32 %v1130, 0.1
        %v1410 = vmul.f32 %v1132, 0.1
        %v1411 = vmul.f32 %v1135, 0.1
        %v1412 = vmul.f32 %v1137, 0.1
        %v1413 = vmul.f32 %v1140, 0.1
        %v1414 = vmul.f32 %v1142, 0.1
        %v1415 = vmul.f32 %v1145, 0.1
        %v1416 = vmul.f32 %v1147, 0.1
        %v1417 = vmul.f32 %v1150, 0.1
        %v1418 = vmul.f32 %v1152, 0.1
        %v1419 = vmul.f32 %v1155, 0.1
        %v1420 = vmul.f32 %v1157, 0.1
        %v1421 = vmul.f32 %v1160, 0.1
        %v1422 = vmul.f32 %v1162, 0.1
        %v1423 = vmul.f32 %v1165, 0.1
        %v1424 = vmul.f32 %v1167, 0.1
        %v1425 = vsel %vm1169, %v850, %v1297
        %v1426 = vsel %vm1170, %v852, %v1298
        %v1427 = vsel %vm1171, %v855, %v1299
        %v1428 = vsel %vm1172, %v857, %v1300
        %v1429 = vsel %vm1173, %v860, %v1301
        %v1430 = vsel %vm1174, %v862, %v1302
        %v1431 = vsel %vm1175, %v865, %v1303
        %v1432 = vsel %vm1176, %v867, %v1304
        %v1433 = vsel %vm1177, %v870, %v1305
        %v1434 = vsel %vm1178, %v872, %v1306
        %v1435 = vsel %vm1179, %v875, %v1307
        %v1436 = vsel %vm1180, %v877, %v1308
        %v1437 = vsel %vm1181, %v880, %v1309
        %v1438 = vsel %vm1182, %v882, %v1310
        %v1439 = vsel %vm1183, %v885, %v1311
        %v1440 = vsel %vm1184, %v887, %v1312
        %v1441 = vsel %vm1185, %v890, %v1313
        %v1442 = vsel %vm1186, %v892, %v1314
        %v1443 = vsel %vm1187, %v895, %v1315
        %v1444 = vsel %vm1188, %v897, %v1316
        %v1445 = vsel %vm1189, %v900, %v1317
        %v1446 = vsel %vm1190, %v902, %v1318
        %v1447 = vsel %vm1191, %v905, %v1319
        %v1448 = vsel %vm1192, %v907, %v1320
        %v1449 = vsel %vm1193, %v910, %v1321
        %v1450 = vsel %vm1194, %v912, %v1322
        %v1451 = vsel %vm1195, %v915, %v1323
        %v1452 = vsel %vm1196, %v917, %v1324
        %v1453 = vsel %vm1197, %v920, %v1325
        %v1454 = vsel %vm1198, %v922, %v1326
        %v1455 = vsel %vm1199, %v925, %v1327
        %v1456 = vsel %vm1200, %v927, %v1328
        %v1457 = vsel %vm1201, %v930, %v1329
        %v1458 = vsel %vm1202, %v932, %v1330
        %v1459 = vsel %vm1203, %v935, %v1331
        %v1460 = vsel %vm1204, %v937, %v1332
        %v1461 = vsel %vm1205, %v940, %v1333
        %v1462 = vsel %vm1206, %v942, %v1334
        %v1463 = vsel %vm1207, %v945, %v1335
        %v1464 = vsel %vm1208, %v947, %v1336
        %v1465 = vsel %vm1209, %v950, %v1337
        %v1466 = vsel %vm1210, %v952, %v1338
        %v1467 = vsel %vm1211, %v955, %v1339
        %v1468 = vsel %vm1212, %v957, %v1340
        %v1469 = vsel %vm1213, %v960, %v1341
        %v1470 = vsel %vm1214, %v962, %v1342
        %v1471 = vsel %vm1215, %v965, %v1343
        %v1472 = vsel %vm1216, %v967, %v1344
        %v1473 = vsel %vm1217, %v970, %v1345
        %v1474 = vsel %vm1218, %v972, %v1346
        %v1475 = vsel %vm1219, %v975, %v1347
        %v1476 = vsel %vm1220, %v977, %v1348
        %v1477 = vsel %vm1221, %v980, %v1349
        %v1478 = vsel %vm1222, %v982, %v1350
        %v1479 = vsel %vm1223, %v985, %v1351
        %v1480 = vsel %vm1224, %v987, %v1352
        %v1481 = vsel %vm1225, %v990, %v1353
        %v1482 = vsel %vm1226, %v992, %v1354
        %v1483 = vsel %vm1227, %v995, %v1355
        %v1484 = vsel %vm1228, %v997, %v1356
        %v1485 = vsel %vm1229, %v1000, %v1357
        %v1486 = vsel %vm1230, %v1002, %v1358
        %v1487 = vsel %vm1231, %v1005, %v1359
        %v1488 = vsel %vm1232, %v1007, %v1360
        %v1489 = vsel %vm1233, %v1010, %v1361
        %v1490 = vsel %vm1234, %v1012, %v1362
        %v1491 = vsel %vm1235, %v1015, %v1363
        %v1492 = vsel %vm1236, %v1017, %v1364
        %v1493 = vsel %vm1237, %v1020, %v1365
        %v1494 = vsel %vm1238, %v1022, %v1366
        %v1495 = vsel %vm1239, %v1025, %v1367
        %v1496 = vsel %vm1240, %v1027, %v1368
        %v1497 = vsel %vm1241, %v1030, %v1369
        %v1498 = vsel %vm1242, %v1032, %v1370
        %v1499 = vsel %vm1243, %v1035, %v1371
        %v1500 = vsel %vm1244, %v1037, %v1372
        %v1501 = vsel %vm1245, %v1040, %v1373
        %v1502 = vsel %vm1246, %v1042, %v1374
        %v1503 = vsel %vm1247, %v1045, %v1375
        %v1504 = vsel %vm1248, %v1047, %v1376
        %v1505 = vsel %vm1249, %v1050, %v1377
        %v1506 = vsel %vm1250, %v1052, %v1378
        %v1507 = vsel %vm1251, %v1055, %v1379
        %v1508 = vsel %vm1252, %v1057, %v1380
        %v1509 = vsel %vm1253, %v1060, %v1381
        %v1510 = vsel %vm1254, %v1062, %v1382
        %v1511 = vsel %vm1255, %v1065, %v1383
        %v1512 = vsel %vm1256, %v1067, %v1384
        %v1513 = vsel %vm1257, %v1070, %v1385
        %v1514 = vsel %vm1258, %v1072, %v1386
        %v1515 = vsel %vm1259, %v1075, %v1387
        %v1516 = vsel %vm1260, %v1077, %v1388
        %v1517 = vsel %vm1261, %v1080, %v1389
        %v1518 = vsel %vm1262, %v1082, %v1390
        %v1519 = vsel %vm1263, %v1085, %v1391
        %v1520 = vsel %vm1264, %v1087, %v1392
        %v1521 = vsel %vm1265, %v1090, %v1393
        %v1522 = vsel %vm1266, %v1092, %v1394
        %v1523 = vsel %vm1267, %v1095, %v1395
        %v1524 = vsel %vm1268, %v1097, %v1396
        %v1525 = vsel %vm1269, %v1100, %v1397
        %v1526 = vsel %vm1270, %v1102, %v1398
        %v1527 = vsel %vm1271, %v1105, %v1399
        %v1528 = vsel %vm1272, %v1107, %v1400
        %v1529 = vsel %vm1273, %v1110, %v1401
        %v1530 = vsel %vm1274, %v1112, %v1402
        %v1531 = vsel %vm1275, %v1115, %v1403
        %v1532 = vsel %vm1276, %v1117, %v1404
        %v1533 = vsel %vm1277, %v1120, %v1405
        %v1534 = vsel %vm1278, %v1122, %v1406
        %v1535 = vsel %vm1279, %v1125, %v1407
        %v1536 = vsel %vm1280, %v1127, %v1408
        %v1537 = vsel %vm1281, %v1130, %v1409
        %v1538 = vsel %vm1282, %v1132, %v1410
        %v1539 = vsel %vm1283, %v1135, %v1411
        %v1540 = vsel %vm1284, %v1137, %v1412
        %v1541 = vsel %vm1285, %v1140, %v1413
        %v1542 = vsel %vm1286, %v1142, %v1414
        %v1543 = vsel %vm1287, %v1145, %v1415
        %v1544 = vsel %vm1288, %v1147, %v1416
        %v1545 = vsel %vm1289, %v1150, %v1417
        %v1546 = vsel %vm1290, %v1152, %v1418
        %v1547 = vsel %vm1291, %v1155, %v1419
        %v1548 = vsel %vm1292, %v1157, %v1420
        %v1549 = vsel %vm1293, %v1160, %v1421
        %v1550 = vsel %vm1294, %v1162, %v1422
        %v1551 = vsel %vm1295, %v1165, %v1423
        %v1552 = vsel %vm1296, %v1167, %v1424
        %v1553 = vpack.c.bf16 %v1425, %v1425
        %v1554 = vpack.c.bf16 %v1426, %v1426
        %v1555 = vpack.c.bf16 %v1427, %v1427
        %v1556 = vpack.c.bf16 %v1428, %v1428
        %v1557 = vpack.c.bf16 %v1429, %v1429
        %v1558 = vpack.c.bf16 %v1430, %v1430
        %v1559 = vpack.c.bf16 %v1431, %v1431
        %v1560 = vpack.c.bf16 %v1432, %v1432
        %v1561 = vpack.c.bf16 %v1433, %v1433
        %v1562 = vpack.c.bf16 %v1434, %v1434
        %v1563 = vpack.c.bf16 %v1435, %v1435
        %v1564 = vpack.c.bf16 %v1436, %v1436
        %v1565 = vpack.c.bf16 %v1437, %v1437
        %v1566 = vpack.c.bf16 %v1438, %v1438
        %v1567 = vpack.c.bf16 %v1439, %v1439
        %v1568 = vpack.c.bf16 %v1440, %v1440
        %v1569 = vpack.c.bf16 %v1441, %v1441
        %v1570 = vpack.c.bf16 %v1442, %v1442
        %v1571 = vpack.c.bf16 %v1443, %v1443
        %v1572 = vpack.c.bf16 %v1444, %v1444
        %v1573 = vpack.c.bf16 %v1445, %v1445
        %v1574 = vpack.c.bf16 %v1446, %v1446
        %v1575 = vpack.c.bf16 %v1447, %v1447
        %v1576 = vpack.c.bf16 %v1448, %v1448
        %v1577 = vpack.c.bf16 %v1449, %v1449
        %v1578 = vpack.c.bf16 %v1450, %v1450
        %v1579 = vpack.c.bf16 %v1451, %v1451
        %v1580 = vpack.c.bf16 %v1452, %v1452
        %v1581 = vpack.c.bf16 %v1453, %v1453
        %v1582 = vpack.c.bf16 %v1454, %v1454
        %v1583 = vpack.c.bf16 %v1455, %v1455
        %v1584 = vpack.c.bf16 %v1456, %v1456
        %v1585 = vpack.c.bf16 %v1457, %v1457
        %v1586 = vpack.c.bf16 %v1458, %v1458
        %v1587 = vpack.c.bf16 %v1459, %v1459
        %v1588 = vpack.c.bf16 %v1460, %v1460
        %v1589 = vpack.c.bf16 %v1461, %v1461
        %v1590 = vpack.c.bf16 %v1462, %v1462
        %v1591 = vpack.c.bf16 %v1463, %v1463
        %v1592 = vpack.c.bf16 %v1464, %v1464
        %v1593 = vpack.c.bf16 %v1465, %v1465
        %v1594 = vpack.c.bf16 %v1466, %v1466
        %v1595 = vpack.c.bf16 %v1467, %v1467
        %v1596 = vpack.c.bf16 %v1468, %v1468
        %v1597 = vpack.c.bf16 %v1469, %v1469
        %v1598 = vpack.c.bf16 %v1470, %v1470
        %v1599 = vpack.c.bf16 %v1471, %v1471
        %v1600 = vpack.c.bf16 %v1472, %v1472
        %v1601 = vpack.c.bf16 %v1473, %v1473
        %v1602 = vpack.c.bf16 %v1474, %v1474
        %v1603 = vpack.c.bf16 %v1475, %v1475
        %v1604 = vpack.c.bf16 %v1476, %v1476
        %v1605 = vpack.c.bf16 %v1477, %v1477
        %v1606 = vpack.c.bf16 %v1478, %v1478
        %v1607 = vpack.c.bf16 %v1479, %v1479
        %v1608 = vpack.c.bf16 %v1480, %v1480
        %v1609 = vpack.c.bf16 %v1481, %v1481
        %v1610 = vpack.c.bf16 %v1482, %v1482
        %v1611 = vpack.c.bf16 %v1483, %v1483
        %v1612 = vpack.c.bf16 %v1484, %v1484
        %v1613 = vpack.c.bf16 %v1485, %v1485
        %v1614 = vpack.c.bf16 %v1486, %v1486
        %v1615 = vpack.c.bf16 %v1487, %v1487
        %v1616 = vpack.c.bf16 %v1488, %v1488
        %v1617 = vpack.c.bf16 %v1489, %v1489
        %v1618 = vpack.c.bf16 %v1490, %v1490
        %v1619 = vpack.c.bf16 %v1491, %v1491
        %v1620 = vpack.c.bf16 %v1492, %v1492
        %v1621 = vpack.c.bf16 %v1493, %v1493
        %v1622 = vpack.c.bf16 %v1494, %v1494
        %v1623 = vpack.c.bf16 %v1495, %v1495
        %v1624 = vpack.c.bf16 %v1496, %v1496
        %v1625 = vpack.c.bf16 %v1497, %v1497
        %v1626 = vpack.c.bf16 %v1498, %v1498
        %v1627 = vpack.c.bf16 %v1499, %v1499
        %v1628 = vpack.c.bf16 %v1500, %v1500
        %v1629 = vpack.c.bf16 %v1501, %v1501
        %v1630 = vpack.c.bf16 %v1502, %v1502
        %v1631 = vpack.c.bf16 %v1503, %v1503
        %v1632 = vpack.c.bf16 %v1504, %v1504
        %v1633 = vpack.c.bf16 %v1505, %v1505
        %v1634 = vpack.c.bf16 %v1506, %v1506
        %v1635 = vpack.c.bf16 %v1507, %v1507
        %v1636 = vpack.c.bf16 %v1508, %v1508
        %v1637 = vpack.c.bf16 %v1509, %v1509
        %v1638 = vpack.c.bf16 %v1510, %v1510
        %v1639 = vpack.c.bf16 %v1511, %v1511
        %v1640 = vpack.c.bf16 %v1512, %v1512
        %v1641 = vpack.c.bf16 %v1513, %v1513
        %v1642 = vpack.c.bf16 %v1514, %v1514
        %v1643 = vpack.c.bf16 %v1515, %v1515
        %v1644 = vpack.c.bf16 %v1516, %v1516
        %v1645 = vpack.c.bf16 %v1517, %v1517
        %v1646 = vpack.c.bf16 %v1518, %v1518
        %v1647 = vpack.c.bf16 %v1519, %v1519
        %v1648 = vpack.c.bf16 %v1520, %v1520
        %v1649 = vpack.c.bf16 %v1521, %v1521
        %v1650 = vpack.c.bf16 %v1522, %v1522
        %v1651 = vpack.c.bf16 %v1523, %v1523
        %v1652 = vpack.c.bf16 %v1524, %v1524
        %v1653 = vpack.c.bf16 %v1525, %v1525
        %v1654 = vpack.c.bf16 %v1526, %v1526
        %v1655 = vpack.c.bf16 %v1527, %v1527
        %v1656 = vpack.c.bf16 %v1528, %v1528
        %v1657 = vpack.c.bf16 %v1529, %v1529
        %v1658 = vpack.c.bf16 %v1530, %v1530
        %v1659 = vpack.c.bf16 %v1531, %v1531
        %v1660 = vpack.c.bf16 %v1532, %v1532
        %v1661 = vpack.c.bf16 %v1533, %v1533
        %v1662 = vpack.c.bf16 %v1534, %v1534
        %v1663 = vpack.c.bf16 %v1535, %v1535
        %v1664 = vpack.c.bf16 %v1536, %v1536
        %v1665 = vpack.c.bf16 %v1537, %v1537
        %v1666 = vpack.c.bf16 %v1538, %v1538
        %v1667 = vpack.c.bf16 %v1539, %v1539
        %v1668 = vpack.c.bf16 %v1540, %v1540
        %v1669 = vpack.c.bf16 %v1541, %v1541
        %v1670 = vpack.c.bf16 %v1542, %v1542
        %v1671 = vpack.c.bf16 %v1543, %v1543
        %v1672 = vpack.c.bf16 %v1544, %v1544
        %v1673 = vpack.c.bf16 %v1545, %v1545
        %v1674 = vpack.c.bf16 %v1546, %v1546
        %v1675 = vpack.c.bf16 %v1547, %v1547
        %v1676 = vpack.c.bf16 %v1548, %v1548
        %v1677 = vpack.c.bf16 %v1549, %v1549
        %v1678 = vpack.c.bf16 %v1550, %v1550
        %v1679 = vpack.c.bf16 %v1551, %v1551
        %v1680 = vpack.c.bf16 %v1552, %v1552
        %1681 = vst [vmem:[%s164] sm:$0xf] %v1553
        %1682 = vst [vmem:[%s164 + $0x4] sm:$0xf] %v1554
        %1683 = vst [vmem:[%s164 + $0x8] sm:$0xf] %v1555
        %1684 = vst [vmem:[%s164 + $0xc] sm:$0xf] %v1556
        %1685 = vst [vmem:[%s164 + $0x10] sm:$0xf] %v1557
        %1686 = vst [vmem:[%s164 + $0x14] sm:$0xf] %v1558
        %1687 = vst [vmem:[%s164 + $0x18] sm:$0xf] %v1559
        %1688 = vst [vmem:[%s164 + $0x1c] sm:$0xf] %v1560
        %1689 = vst [vmem:[%s164 + $0x20] sm:$0xf] %v1561
        %1690 = vst [vmem:[%s164 + $0x24] sm:$0xf] %v1562
        %1691 = vst [vmem:[%s164 + $0x28] sm:$0xf] %v1563
        %1692 = vst [vmem:[%s164 + $0x2c] sm:$0xf] %v1564
        %1693 = vst [vmem:[%s164 + $0x30] sm:$0xf] %v1565
        %1694 = vst [vmem:[%s164 + $0x34] sm:$0xf] %v1566
        %1695 = vst [vmem:[%s164 + $0x38] sm:$0xf] %v1567
        %1696 = vst [vmem:[%s164 + $0x3c] sm:$0xf] %v1568
        %1697 = vst [vmem:[%s164 + $0x40] sm:$0xf] %v1569
        %1698 = vst [vmem:[%s164 + $0x44] sm:$0xf] %v1570
        %1699 = vst [vmem:[%s164 + $0x48] sm:$0xf] %v1571
        %1700 = vst [vmem:[%s164 + $0x4c] sm:$0xf] %v1572
        %1701 = vst [vmem:[%s164 + $0x50] sm:$0xf] %v1573
        %1702 = vst [vmem:[%s164 + $0x54] sm:$0xf] %v1574
        %1703 = vst [vmem:[%s164 + $0x58] sm:$0xf] %v1575
        %1704 = vst [vmem:[%s164 + $0x5c] sm:$0xf] %v1576
        %1705 = vst [vmem:[%s164 + $0x60] sm:$0xf] %v1577
        %1706 = vst [vmem:[%s164 + $0x64] sm:$0xf] %v1578
        %1707 = vst [vmem:[%s164 + $0x68] sm:$0xf] %v1579
        %1708 = vst [vmem:[%s164 + $0x6c] sm:$0xf] %v1580
        %1709 = vst [vmem:[%s164 + $0x70] sm:$0xf] %v1581
        %1710 = vst [vmem:[%s164 + $0x74] sm:$0xf] %v1582
        %1711 = vst [vmem:[%s164 + $0x78] sm:$0xf] %v1583
        %1712 = vst [vmem:[%s164 + $0x7c] sm:$0xf] %v1584
        %1713 = vst [vmem:[%s164 + $0x80] sm:$0xf] %v1585
        %1714 = vst [vmem:[%s164 + $0x84] sm:$0xf] %v1586
        %1715 = vst [vmem:[%s164 + $0x88] sm:$0xf] %v1587
        %1716 = vst [vmem:[%s164 + $0x8c] sm:$0xf] %v1588
        %1717 = vst [vmem:[%s164 + $0x90] sm:$0xf] %v1589
        %1718 = vst [vmem:[%s164 + $0x94] sm:$0xf] %v1590
        %1719 = vst [vmem:[%s164 + $0x98] sm:$0xf] %v1591
        %1720 = vst [vmem:[%s164 + $0x9c] sm:$0xf] %v1592
        %1721 = vst [vmem:[%s164 + $0xa0] sm:$0xf] %v1593
        %1722 = vst [vmem:[%s164 + $0xa4] sm:$0xf] %v1594
        %1723 = vst [vmem:[%s164 + $0xa8] sm:$0xf] %v1595
        %1724 = vst [vmem:[%s164 + $0xac] sm:$0xf] %v1596
        %1725 = vst [vmem:[%s164 + $0xb0] sm:$0xf] %v1597
        %1726 = vst [vmem:[%s164 + $0xb4] sm:$0xf] %v1598
        %1727 = vst [vmem:[%s164 + $0xb8] sm:$0xf] %v1599
        %1728 = vst [vmem:[%s164 + $0xbc] sm:$0xf] %v1600
        %1729 = vst [vmem:[%s164 + $0xc0] sm:$0xf] %v1601
        %1730 = vst [vmem:[%s164 + $0xc4] sm:$0xf] %v1602
        %1731 = vst [vmem:[%s164 + $0xc8] sm:$0xf] %v1603
        %1732 = vst [vmem:[%s164 + $0xcc] sm:$0xf] %v1604
        %1733 = vst [vmem:[%s164 + $0xd0] sm:$0xf] %v1605
        %1734 = vst [vmem:[%s164 + $0xd4] sm:$0xf] %v1606
        %1735 = vst [vmem:[%s164 + $0xd8] sm:$0xf] %v1607
        %1736 = vst [vmem:[%s164 + $0xdc] sm:$0xf] %v1608
        %1737 = vst [vmem:[%s164 + $0xe0] sm:$0xf] %v1609
        %1738 = vst [vmem:[%s164 + $0xe4] sm:$0xf] %v1610
        %1739 = vst [vmem:[%s164 + $0xe8] sm:$0xf] %v1611
        %1740 = vst [vmem:[%s164 + $0xec] sm:$0xf] %v1612
        %1741 = vst [vmem:[%s164 + $0xf0] sm:$0xf] %v1613
        %1742 = vst [vmem:[%s164 + $0xf4] sm:$0xf] %v1614
        %1743 = vst [vmem:[%s164 + $0xf8] sm:$0xf] %v1615
        %1744 = vst [vmem:[%s164 + $0xfc] sm:$0xf] %v1616
        %1745 = vst [vmem:[%s164 + $0x100] sm:$0xf] %v1617
        %1746 = vst [vmem:[%s164 + $0x104] sm:$0xf] %v1618
        %1747 = vst [vmem:[%s164 + $0x108] sm:$0xf] %v1619
        %1748 = vst [vmem:[%s164 + $0x10c] sm:$0xf] %v1620
        %1749 = vst [vmem:[%s164 + $0x110] sm:$0xf] %v1621
        %1750 = vst [vmem:[%s164 + $0x114] sm:$0xf] %v1622
        %1751 = vst [vmem:[%s164 + $0x118] sm:$0xf] %v1623
        %1752 = vst [vmem:[%s164 + $0x11c] sm:$0xf] %v1624
        %1753 = vst [vmem:[%s164 + $0x120] sm:$0xf] %v1625
        %1754 = vst [vmem:[%s164 + $0x124] sm:$0xf] %v1626
        %1755 = vst [vmem:[%s164 + $0x128] sm:$0xf] %v1627
        %1756 = vst [vmem:[%s164 + $0x12c] sm:$0xf] %v1628
        %1757 = vst [vmem:[%s164 + $0x130] sm:$0xf] %v1629
        %1758 = vst [vmem:[%s164 + $0x134] sm:$0xf] %v1630
        %1759 = vst [vmem:[%s164 + $0x138] sm:$0xf] %v1631
        %1760 = vst [vmem:[%s164 + $0x13c] sm:$0xf] %v1632
        %1761 = vst [vmem:[%s164 + $0x140] sm:$0xf] %v1633
        %1762 = vst [vmem:[%s164 + $0x144] sm:$0xf] %v1634
        %1763 = vst [vmem:[%s164 + $0x148] sm:$0xf] %v1635
        %1764 = vst [vmem:[%s164 + $0x14c] sm:$0xf] %v1636
        %1765 = vst [vmem:[%s164 + $0x150] sm:$0xf] %v1637
        %1766 = vst [vmem:[%s164 + $0x154] sm:$0xf] %v1638
        %1767 = vst [vmem:[%s164 + $0x158] sm:$0xf] %v1639
        %1768 = vst [vmem:[%s164 + $0x15c] sm:$0xf] %v1640
        %1769 = vst [vmem:[%s164 + $0x160] sm:$0xf] %v1641
        %1770 = vst [vmem:[%s164 + $0x164] sm:$0xf] %v1642
        %1771 = vst [vmem:[%s164 + $0x168] sm:$0xf] %v1643
        %1772 = vst [vmem:[%s164 + $0x16c] sm:$0xf] %v1644
        %1773 = vst [vmem:[%s164 + $0x170] sm:$0xf] %v1645
        %1774 = vst [vmem:[%s164 + $0x174] sm:$0xf] %v1646
        %1775 = vst [vmem:[%s164 + $0x178] sm:$0xf] %v1647
        %1776 = vst [vmem:[%s164 + $0x17c] sm:$0xf] %v1648
        %1777 = vst [vmem:[%s164 + $0x180] sm:$0xf] %v1649
        %1778 = vst [vmem:[%s164 + $0x184] sm:$0xf] %v1650
        %1779 = vst [vmem:[%s164 + $0x188] sm:$0xf] %v1651
        %1780 = vst [vmem:[%s164 + $0x18c] sm:$0xf] %v1652
        %1781 = vst [vmem:[%s164 + $0x190] sm:$0xf] %v1653
        %1782 = vst [vmem:[%s164 + $0x194] sm:$0xf] %v1654
        %1783 = vst [vmem:[%s164 + $0x198] sm:$0xf] %v1655
        %1784 = vst [vmem:[%s164 + $0x19c] sm:$0xf] %v1656
        %1785 = vst [vmem:[%s164 + $0x1a0] sm:$0xf] %v1657
        %1786 = vst [vmem:[%s164 + $0x1a4] sm:$0xf] %v1658
        %1787 = vst [vmem:[%s164 + $0x1a8] sm:$0xf] %v1659
        %1788 = vst [vmem:[%s164 + $0x1ac] sm:$0xf] %v1660
        %1789 = vst [vmem:[%s164 + $0x1b0] sm:$0xf] %v1661
        %1790 = vst [vmem:[%s164 + $0x1b4] sm:$0xf] %v1662
        %1791 = vst [vmem:[%s164 + $0x1b8] sm:$0xf] %v1663
        %1792 = vst [vmem:[%s164 + $0x1bc] sm:$0xf] %v1664
        %1793 = vst [vmem:[%s164 + $0x1c0] sm:$0xf] %v1665
        %1794 = vst [vmem:[%s164 + $0x1c4] sm:$0xf] %v1666
        %1795 = vst [vmem:[%s164 + $0x1c8] sm:$0xf] %v1667
        %1796 = vst [vmem:[%s164 + $0x1cc] sm:$0xf] %v1668
        %1797 = vst [vmem:[%s164 + $0x1d0] sm:$0xf] %v1669
        %1798 = vst [vmem:[%s164 + $0x1d4] sm:$0xf] %v1670
        %1799 = vst [vmem:[%s164 + $0x1d8] sm:$0xf] %v1671
        %1800 = vst [vmem:[%s164 + $0x1dc] sm:$0xf] %v1672
        %1801 = vst [vmem:[%s164 + $0x1e0] sm:$0xf] %v1673
        %1802 = vst [vmem:[%s164 + $0x1e4] sm:$0xf] %v1674
        %1803 = vst [vmem:[%s164 + $0x1e8] sm:$0xf] %v1675
        %1804 = vst [vmem:[%s164 + $0x1ec] sm:$0xf] %v1676
        %1805 = vst [vmem:[%s164 + $0x1f0] sm:$0xf] %v1677
        %1806 = vst [vmem:[%s164 + $0x1f4] sm:$0xf] %v1678
        %1807 = vst [vmem:[%s164 + $0x1f8] sm:$0xf] %v1679
        %1808 = vst [vmem:[%s164 + $0x1fc] sm:$0xf] %v1680
        %s1809 = sand.u32 %s93, 1
        %s1810 = scalar_lea.sflag [#allocation3], %s1809
        %s1811 = sand.u32 %s93, 1
        %s1812 = smul.addr %s1811, 512
        %s1813 = scalar_lea.vmem [#allocation2], %s1812
        // Predicated region
        $region33: #{_fused_matmul.1} parent=31 // pred_check
          %p1814 = pneg %p103
        $region34: #{_fused_matmul.1} parent=31 // pred_check_branch
          %1816 = sbr.rel (%p1814) target = $region36
        $region35: #{_fused_matmul.1} parent=31 // pred_region
          %s1817 = smul.u32 128, %s17
          %1819 = vsyncadd %s1810, 0
          %s1820 = smul.addr %s1817, 4
          %s1821 = scalar_lea.hbm %s3, %s1820
          %s1822 = sshll.u32 %s1813, 4
          %s1823 = int_to_ptr.vmem [resolvable:$true] %s1822
          %s1824 = sshll.u32 %s1821, 4
          %s1825 = int_to_ptr.hbm [resolvable:$true] %s1824
          %1830 = dma.vmem_to_hbm [thread:$0]  %s1823, 8192, %s1825, %s1810, 64, 64, 4
        $region36: #{_fused_matmul.1} parent=31 // pred_fallthru
          _
      $region32: #{_fused_matmul.1} parent=5 // pred_fallthru
        _
      %p1831 = scmp.le.s32.totalorder 2, %s12
      // Predicated region
      $region37: #{_fused_matmul.1} parent=5 // pred_check
        %p1832 = pneg %p1831
      $region38: #{_fused_matmul.1} parent=5 // pred_check_branch
        %1834 = sbr.rel (%p1832) target = $region40
      $region39: #{_fused_matmul.1} parent=5 // pred_region
        %s1835 = ssub.s32 %s12, 2
        // Predicated region
        $region41: #{_fused_matmul.1} parent=39 // pred_check
          %p1836 = pneg %p109
        $region42: #{_fused_matmul.1} parent=39 // pred_check_branch
          %1838 = sbr.rel (%p1836) target = $region44
        $region43: #{_fused_matmul.1} parent=39 // pred_region
          %s1839 = sand.u32 %s94, 1
          %s1840 = scalar_lea.sflag [#allocation3], %s1839
          %s1841 = sand.u32 %s94, 1
          %s1842 = smul.addr %s1841, 512
          %s1843 = scalar_lea.vmem [#allocation2], %s1842
          %1845 = dma.done %s1840, 8192
        $region44: #{_fused_matmul.1} parent=39 // pred_fallthru
          _
      $region40: #{_fused_matmul.1} parent=5 // pred_fallthru
        _
    $region6: #{_fused_matmul.1} parent=1 // loop_footer
      %s16 = sadd.s32 1, %s12
    $region7: #{_fused_matmul.1} parent=1 // loop_footer_branch
      %11 = sbr.rel target = $region3
    $region8: #{_fused_matmul.1} parent=1 // loop_exit
      _
    %1846 = vsyncpa [#allocation3], 1
    %s1847 = scalar_lea.sflag [#allocation3], 1
    %1848 = vsyncpa %s1847, 1

</llo_original>
